<compile_context>
chip_gen: v7x
topology: tpu7x:2x2x1
jax: 0.10.0
libtpu: 0.0.40
codegen_flags: <defaults>
</compile_context>

<pallas_src>
import functools

import jax
import jax.numpy as jnp
from jax.experimental import pallas as pl
from jax.experimental.pallas import tpu as pltpu


def rnn_kernel(x_ref, *args, hidden_size, num_layers, seq_len, batch_pad):
    # args layout:
    #   [w_ih_T, w_hh_T, bias] * num_layers, w_lin_T, b_lin,   (inputs)
    #   out_ref,                                               (output)
    #   seq_buf, gx_buf                                        (scratch)
    del hidden_size  # implicit in the ref shapes
    Bp = batch_pad
    n_w = 3 * num_layers
    layer_refs = args[:n_w]
    wlin_ref, blin_ref = args[n_w], args[n_w + 1]
    out_ref = args[n_w + 2]
    seq_buf, gx_buf = args[n_w + 3], args[n_w + 4]

    h = jnp.zeros_like(gx_buf[pl.ds(0, Bp), :])
    for layer in range(num_layers):
        wih_ref = layer_refs[3 * layer + 0]
        whh_ref = layer_refs[3 * layer + 1]
        b_ref = layer_refs[3 * layer + 2]

        # ---- hoisted input projection + bias: one (S*Bp, In) @ (In, H) ----
        # Rows [t*Bp, (t+1)*Bp) of x / seq_buf hold timestep t.
        x_seq = x_ref[...] if layer == 0 else seq_buf[...]
        gx_buf[...] = (
            jnp.dot(x_seq, wih_ref[...], preferred_element_type=jnp.float32)
            + b_ref[...]
        )

        whh = whh_ref[...]                       # hoist recurrent weight load
        last_layer = layer == num_layers - 1

        # ---- serial recurrence, fully unrolled (static trip count) ----
        # Only one (Bp, H) @ (H, H) matmul per step remains on the critical
        # path; gate input and bias come from the precomputed gx_buf.
        h = jnp.zeros_like(h)                    # h0 = 0, matches the module
        for t in range(seq_len):
            r0 = t * Bp                          # static, 8-aligned offset
            h = jnp.tanh(
                gx_buf[pl.ds(r0, Bp), :]
                + jnp.dot(h, whh, preferred_element_type=jnp.float32)
            )
            if not last_layer:
                seq_buf[pl.ds(r0, Bp), :] = h    # feeds next layer's big matmul

    # final Linear(hidden, 1) on the last timestep of the top layer + sigmoid
    out_ref[...] = jax.nn.sigmoid(
        jnp.dot(h, wlin_ref[...], preferred_element_type=jnp.float32)
        + blin_ref[...]
    )


def rnn_forward(x, params, hidden_size, num_layers):
    """x: (batch, seq, input_size) float32 -> (batch, 1) float32."""
    B, S, I = x.shape
    Bp = ((B + 7) // 8) * 8                      # pad batch to sublane multiple
    x_tm = jnp.transpose(x, (1, 0, 2)).astype(jnp.float32)      # (S, B, I)
    x_tm = jnp.pad(x_tm, ((0, 0), (0, Bp - B), (0, 0)))         # (S, Bp, I)
    x2d = x_tm.reshape(S * Bp, I)                # time-major, 2D for the MXU

    inputs = [x2d]
    for l in range(num_layers):
        w_ih, w_hh, b_ih, b_hh = params["rnn"][l]
        # pre-transpose so every in-kernel matmul is row-major (M, K) @ (K, N);
        # fold both biases into one row that the hoisted matmul broadcasts once.
        inputs += [
            jnp.asarray(w_ih).T.astype(jnp.float32),
            jnp.asarray(w_hh).T.astype(jnp.float32),
            (b_ih + b_hh)[None, :].astype(jnp.float32),
        ]
    w_lin, b_lin = params["linear"]
    inputs += [jnp.asarray(w_lin).T.astype(jnp.float32),
               jnp.asarray(b_lin)[None, :].astype(jnp.float32)]

    kernel = functools.partial(
        rnn_kernel,
        hidden_size=hidden_size,
        num_layers=num_layers,
        seq_len=S,
        batch_pad=Bp,
    )
    out = pl.pallas_call(
        kernel,
        out_shape=jax.ShapeDtypeStruct((Bp, 1), jnp.float32),
        in_specs=[pl.BlockSpec(memory_space=pltpu.MemorySpace.VMEM)] * len(inputs),
        out_specs=pl.BlockSpec(memory_space=pltpu.MemorySpace.VMEM),
        scratch_shapes=[
            pltpu.VMEM((S * Bp, hidden_size), jnp.float32),  # per-layer seq out
            pltpu.VMEM((S * Bp, hidden_size), jnp.float32),  # hoisted x-proj
        ],
        compiler_params=pltpu.CompilerParams(
            vmem_limit_bytes=32 * 1024 * 1024,
        ),
    )(*inputs)
    return out[:B]


def rnn_ref(x, params, hidden_size, num_layers):
    """Pure-JAX reference matching torch.nn.RNN (tanh) + Linear + Sigmoid."""
    B, S, _ = x.shape
    H = hidden_size
    layer_in = x
    for l in range(num_layers):
        w_ih, w_hh, b_ih, b_hh = params["rnn"][l]
        h = jnp.zeros((B, H), jnp.float32)
        outs = []
        for t in range(S):
            h = jnp.tanh(layer_in[:, t, :] @ w_ih.T + b_ih + h @ w_hh.T + b_hh)
            outs.append(h)
        layer_in = jnp.stack(outs, axis=1)
    w_lin, b_lin = params["linear"]
    return jax.nn.sigmoid(layer_in[:, -1, :] @ w_lin.T + b_lin)


def init_params(key, input_size, hidden_size, num_layers):
    """Deterministic init mimicking PyTorch's U(-1/sqrt(H), 1/sqrt(H))."""
    k = 1.0 / jnp.sqrt(hidden_size)
    params = {"rnn": []}
    for l in range(num_layers):
        in_l = input_size if l == 0 else hidden_size
        key, k1, k2, k3, k4 = jax.random.split(key, 5)
        w_ih = jax.random.uniform(k1, (hidden_size, in_l), jnp.float32, -k, k)
        w_hh = jax.random.uniform(k2, (hidden_size, hidden_size), jnp.float32, -k, k)
        b_ih = jax.random.uniform(k3, (hidden_size,), jnp.float32, -k, k)
        b_hh = jax.random.uniform(k4, (hidden_size,), jnp.float32, -k, k)
        params["rnn"].append((w_ih, w_hh, b_ih, b_hh))
    key, k1, k2 = jax.random.split(key, 3)
    w_lin = jax.random.uniform(k1, (1, hidden_size), jnp.float32, -k, k)
    b_lin = jax.random.uniform(k2, (1,), jnp.float32, -k, k)
    params["linear"] = (w_lin, b_lin)
    return params


if __name__ == "__main__":
    batch, seq, input_size, hidden_size, num_layers = 2, 8, 4, 32, 2

    key = jax.random.PRNGKey(0)
    key, xk = jax.random.split(key)
    x = jax.random.normal(xk, (batch, seq, input_size), jnp.float32)
    params = init_params(key, input_size, hidden_size, num_layers)

    out = rnn_forward(x, params, hidden_size, num_layers)
    out = jax.block_until_ready(out)

    ref = rnn_ref(x, params, hidden_size, num_layers)
    assert out.shape == (batch, 1), out.shape
    assert jnp.allclose(out, ref, atol=1e-5, rtol=1e-5), (out, ref)

    print("KERNEL_OK")
</pallas_src>

<mosaic_0001>
module attributes {stable_mosaic.version = 11 : i64} {
  func.func @rnn_kernel(%arg0: memref<64x4xf32, #tpu.memory_space<vmem>>, %arg1: memref<4x32xf32, #tpu.memory_space<vmem>>, %arg2: memref<32x32xf32, #tpu.memory_space<vmem>>, %arg3: memref<1x32xf32, #tpu.memory_space<vmem>>, %arg4: memref<32x32xf32, #tpu.memory_space<vmem>>, %arg5: memref<32x32xf32, #tpu.memory_space<vmem>>, %arg6: memref<1x32xf32, #tpu.memory_space<vmem>>, %arg7: memref<32x1xf32, #tpu.memory_space<vmem>>, %arg8: memref<1x1xf32, #tpu.memory_space<vmem>>, %arg9: memref<8x1xf32, #tpu.memory_space<vmem>>, %arg10: memref<64x32xf32, #tpu.memory_space<vmem>>, %arg11: memref<64x32xf32, #tpu.memory_space<vmem>>) attributes {dimension_semantics = [], scalar_prefetch = 0 : i64, scratch_operands = 2 : i64, tpu.core_type = #tpu.core_type<tc>} {
    %c0 = arith.constant 0 : index
    %c0_0 = arith.constant 0 : index
    %0 = vector.load %arg0[%c0, %c0_0] : memref<64x4xf32, #tpu.memory_space<vmem>>, vector<64x4xf32>
    %c0_1 = arith.constant 0 : index
    %c0_2 = arith.constant 0 : index
    %1 = vector.load %arg1[%c0_1, %c0_2] : memref<4x32xf32, #tpu.memory_space<vmem>>, vector<4x32xf32>
    %cst = arith.constant dense<0.000000e+00> : vector<64x32xf32>
    %2 = tpu.matmul %0, %1, %cst {dimension_numbers = #tpu.dot_dimension_numbers<[1], [0], [0], [1], [0, 0, 1, 1], [], []>} : vector<64x4xf32>, vector<4x32xf32>, vector<64x32xf32> -> vector<64x32xf32>
    %c0_3 = arith.constant 0 : index
    %c0_4 = arith.constant 0 : index
    %3 = vector.load %arg3[%c0_3, %c0_4] : memref<1x32xf32, #tpu.memory_space<vmem>>, vector<1x32xf32>
    %4 = vector.broadcast %3 : vector<1x32xf32> to vector<64x32xf32>
    %5 = arith.addf %2, %4 : vector<64x32xf32>
    %c0_5 = arith.constant 0 : index
    %c0_6 = arith.constant 0 : index
    %6 = vector.load %arg11[%c0_5, %c0_6] : memref<64x32xf32, #tpu.memory_space<vmem>>, vector<64x32xf32>
    tpu.vector_store %arg11[%c0_5, %c0_6], %5 {strides = array<i32>} : memref<64x32xf32, #tpu.memory_space<vmem>>, vector<64x32xf32>,
    %c0_7 = arith.constant 0 : index
    %c0_8 = arith.constant 0 : index
    %7 = vector.load %arg2[%c0_7, %c0_8] : memref<32x32xf32, #tpu.memory_space<vmem>>, vector<32x32xf32>
    %cst_9 = arith.constant 0.000000e+00 : f32
    %8 = vector.broadcast %cst_9 : f32 to vector<8x32xf32>
    %c0_10 = arith.constant 0 : index
    %c0_11 = arith.constant 0 : index
    %9 = vector.load %arg11[%c0_10, %c0_11] : memref<64x32xf32, #tpu.memory_space<vmem>>, vector<8x32xf32>
    %cst_12 = arith.constant dense<0.000000e+00> : vector<8x32xf32>
    %10 = tpu.matmul %8, %7, %cst_12 {dimension_numbers = #tpu.dot_dimension_numbers<[1], [0], [0], [1], [0, 0, 1, 1], [], []>} : vector<8x32xf32>, vector<32x32xf32>, vector<8x32xf32> -> vector<8x32xf32>
    %11 = arith.addf %9, %10 : vector<8x32xf32>
    %12 = math.tanh %11 : vector<8x32xf32>
    %c0_13 = arith.constant 0 : index
    %c0_14 = arith.constant 0 : index
    %13 = vector.load %arg10[%c0_13, %c0_14] : memref<64x32xf32, #tpu.memory_space<vmem>>, vector<8x32xf32>
    tpu.vector_store %arg10[%c0_13, %c0_14], %12 {strides = array<i32>} : memref<64x32xf32, #tpu.memory_space<vmem>>, vector<8x32xf32>,
    %c8 = arith.constant 8 : index
    %c0_15 = arith.constant 0 : index
    %14 = vector.load %arg11[%c8, %c0_15] : memref<64x32xf32, #tpu.memory_space<vmem>>, vector<8x32xf32>
    %cst_16 = arith.constant dense<0.000000e+00> : vector<8x32xf32>
    %15 = tpu.matmul %12, %7, %cst_16 {dimension_numbers = #tpu.dot_dimension_numbers<[1], [0], [0], [1], [0, 0, 1, 1], [], []>} : vector<8x32xf32>, vector<32x32xf32>, vector<8x32xf32> -> vector<8x32xf32>
    %16 = arith.addf %14, %15 : vector<8x32xf32>
    %17 = math.tanh %16 : vector<8x32xf32>
    %c8_17 = arith.constant 8 : index
    %c0_18 = arith.constant 0 : index
    %18 = vector.load %arg10[%c8_17, %c0_18] : memref<64x32xf32, #tpu.memory_space<vmem>>, vector<8x32xf32>
    tpu.vector_store %arg10[%c8_17, %c0_18], %17 {strides = array<i32>} : memref<64x32xf32, #tpu.memory_space<vmem>>, vector<8x32xf32>,
    %c16 = arith.constant 16 : index
    %c0_19 = arith.constant 0 : index
    %19 = vector.load %arg11[%c16, %c0_19] : memref<64x32xf32, #tpu.memory_space<vmem>>, vector<8x32xf32>
    %cst_20 = arith.constant dense<0.000000e+00> : vector<8x32xf32>
    %20 = tpu.matmul %17, %7, %cst_20 {dimension_numbers = #tpu.dot_dimension_numbers<[1], [0], [0], [1], [0, 0, 1, 1], [], []>} : vector<8x32xf32>, vector<32x32xf32>, vector<8x32xf32> -> vector<8x32xf32>
    %21 = arith.addf %19, %20 : vector<8x32xf32>
    %22 = math.tanh %21 : vector<8x32xf32>
    %c16_21 = arith.constant 16 : index
    %c0_22 = arith.constant 0 : index
    %23 = vector.load %arg10[%c16_21, %c0_22] : memref<64x32xf32, #tpu.memory_space<vmem>>, vector<8x32xf32>
    tpu.vector_store %arg10[%c16_21, %c0_22], %22 {strides = array<i32>} : memref<64x32xf32, #tpu.memory_space<vmem>>, vector<8x32xf32>,
    %c24 = arith.constant 24 : index
    %c0_23 = arith.constant 0 : index
    %24 = vector.load %arg11[%c24, %c0_23] : memref<64x32xf32, #tpu.memory_space<vmem>>, vector<8x32xf32>
    %cst_24 = arith.constant dense<0.000000e+00> : vector<8x32xf32>
    %25 = tpu.matmul %22, %7, %cst_24 {dimension_numbers = #tpu.dot_dimension_numbers<[1], [0], [0], [1], [0, 0, 1, 1], [], []>} : vector<8x32xf32>, vector<32x32xf32>, vector<8x32xf32> -> vector<8x32xf32>
    %26 = arith.addf %24, %25 : vector<8x32xf32>
    %27 = math.tanh %26 : vector<8x32xf32>
    %c24_25 = arith.constant 24 : index
    %c0_26 = arith.constant 0 : index
    %28 = vector.load %arg10[%c24_25, %c0_26] : memref<64x32xf32, #tpu.memory_space<vmem>>, vector<8x32xf32>
    tpu.vector_store %arg10[%c24_25, %c0_26], %27 {strides = array<i32>} : memref<64x32xf32, #tpu.memory_space<vmem>>, vector<8x32xf32>,
    %c32 = arith.constant 32 : index
    %c0_27 = arith.constant 0 : index
    %29 = vector.load %arg11[%c32, %c0_27] : memref<64x32xf32, #tpu.memory_space<vmem>>, vector<8x32xf32>
    %cst_28 = arith.constant dense<0.000000e+00> : vector<8x32xf32>
    %30 = tpu.matmul %27, %7, %cst_28 {dimension_numbers = #tpu.dot_dimension_numbers<[1], [0], [0], [1], [0, 0, 1, 1], [], []>} : vector<8x32xf32>, vector<32x32xf32>, vector<8x32xf32> -> vector<8x32xf32>
    %31 = arith.addf %29, %30 : vector<8x32xf32>
    %32 = math.tanh %31 : vector<8x32xf32>
    %c32_29 = arith.constant 32 : index
    %c0_30 = arith.constant 0 : index
    %33 = vector.load %arg10[%c32_29, %c0_30] : memref<64x32xf32, #tpu.memory_space<vmem>>, vector<8x32xf32>
    tpu.vector_store %arg10[%c32_29, %c0_30], %32 {strides = array<i32>} : memref<64x32xf32, #tpu.memory_space<vmem>>, vector<8x32xf32>,
    %c40 = arith.constant 40 : index
    %c0_31 = arith.constant 0 : index
    %34 = vector.load %arg11[%c40, %c0_31] : memref<64x32xf32, #tpu.memory_space<vmem>>, vector<8x32xf32>
    %cst_32 = arith.constant dense<0.000000e+00> : vector<8x32xf32>
    %35 = tpu.matmul %32, %7, %cst_32 {dimension_numbers = #tpu.dot_dimension_numbers<[1], [0], [0], [1], [0, 0, 1, 1], [], []>} : vector<8x32xf32>, vector<32x32xf32>, vector<8x32xf32> -> vector<8x32xf32>
    %36 = arith.addf %34, %35 : vector<8x32xf32>
    %37 = math.tanh %36 : vector<8x32xf32>
    %c40_33 = arith.constant 40 : index
    %c0_34 = arith.constant 0 : index
    %38 = vector.load %arg10[%c40_33, %c0_34] : memref<64x32xf32, #tpu.memory_space<vmem>>, vector<8x32xf32>
    tpu.vector_store %arg10[%c40_33, %c0_34], %37 {strides = array<i32>} : memref<64x32xf32, #tpu.memory_space<vmem>>, vector<8x32xf32>,
    %c48 = arith.constant 48 : index
    %c0_35 = arith.constant 0 : index
    %39 = vector.load %arg11[%c48, %c0_35] : memref<64x32xf32, #tpu.memory_space<vmem>>, vector<8x32xf32>
    %cst_36 = arith.constant dense<0.000000e+00> : vector<8x32xf32>
    %40 = tpu.matmul %37, %7, %cst_36 {dimension_numbers = #tpu.dot_dimension_numbers<[1], [0], [0], [1], [0, 0, 1, 1], [], []>} : vector<8x32xf32>, vector<32x32xf32>, vector<8x32xf32> -> vector<8x32xf32>
    %41 = arith.addf %39, %40 : vector<8x32xf32>
    %42 = math.tanh %41 : vector<8x32xf32>
    %c48_37 = arith.constant 48 : index
    %c0_38 = arith.constant 0 : index
    %43 = vector.load %arg10[%c48_37, %c0_38] : memref<64x32xf32, #tpu.memory_space<vmem>>, vector<8x32xf32>
    tpu.vector_store %arg10[%c48_37, %c0_38], %42 {strides = array<i32>} : memref<64x32xf32, #tpu.memory_space<vmem>>, vector<8x32xf32>,
    %c56 = arith.constant 56 : index
    %c0_39 = arith.constant 0 : index
    %44 = vector.load %arg11[%c56, %c0_39] : memref<64x32xf32, #tpu.memory_space<vmem>>, vector<8x32xf32>
    %cst_40 = arith.constant dense<0.000000e+00> : vector<8x32xf32>
    %45 = tpu.matmul %42, %7, %cst_40 {dimension_numbers = #tpu.dot_dimension_numbers<[1], [0], [0], [1], [0, 0, 1, 1], [], []>} : vector<8x32xf32>, vector<32x32xf32>, vector<8x32xf32> -> vector<8x32xf32>
    %46 = arith.addf %44, %45 : vector<8x32xf32>
    %47 = math.tanh %46 : vector<8x32xf32>
    %c56_41 = arith.constant 56 : index
    %c0_42 = arith.constant 0 : index
    %48 = vector.load %arg10[%c56_41, %c0_42] : memref<64x32xf32, #tpu.memory_space<vmem>>, vector<8x32xf32>
    tpu.vector_store %arg10[%c56_41, %c0_42], %47 {strides = array<i32>} : memref<64x32xf32, #tpu.memory_space<vmem>>, vector<8x32xf32>,
    %c0_43 = arith.constant 0 : index
    %c0_44 = arith.constant 0 : index
    %49 = vector.load %arg10[%c0_43, %c0_44] : memref<64x32xf32, #tpu.memory_space<vmem>>, vector<64x32xf32>
    %c0_45 = arith.constant 0 : index
    %c0_46 = arith.constant 0 : index
    %50 = vector.load %arg4[%c0_45, %c0_46] : memref<32x32xf32, #tpu.memory_space<vmem>>, vector<32x32xf32>
    %cst_47 = arith.constant dense<0.000000e+00> : vector<64x32xf32>
    %51 = tpu.matmul %49, %50, %cst_47 {dimension_numbers = #tpu.dot_dimension_numbers<[1], [0], [0], [1], [0, 0, 1, 1], [], []>} : vector<64x32xf32>, vector<32x32xf32>, vector<64x32xf32> -> vector<64x32xf32>
    %c0_48 = arith.constant 0 : index
    %c0_49 = arith.constant 0 : index
    %52 = vector.load %arg6[%c0_48, %c0_49] : memref<1x32xf32, #tpu.memory_space<vmem>>, vector<1x32xf32>
    %53 = vector.broadcast %52 : vector<1x32xf32> to vector<64x32xf32>
    %54 = arith.addf %51, %53 : vector<64x32xf32>
    %c0_50 = arith.constant 0 : index
    %c0_51 = arith.constant 0 : index
    %55 = vector.load %arg11[%c0_50, %c0_51] : memref<64x32xf32, #tpu.memory_space<vmem>>, vector<64x32xf32>
    tpu.vector_store %arg11[%c0_50, %c0_51], %54 {strides = array<i32>} : memref<64x32xf32, #tpu.memory_space<vmem>>, vector<64x32xf32>,
    %c0_52 = arith.constant 0 : index
    %c0_53 = arith.constant 0 : index
    %56 = vector.load %arg5[%c0_52, %c0_53] : memref<32x32xf32, #tpu.memory_space<vmem>>, vector<32x32xf32>
    %cst_54 = arith.constant 0.000000e+00 : f32
    %57 = vector.broadcast %cst_54 : f32 to vector<8x32xf32>
    %c0_55 = arith.constant 0 : index
    %c0_56 = arith.constant 0 : index
    %58 = vector.load %arg11[%c0_55, %c0_56] : memref<64x32xf32, #tpu.memory_space<vmem>>, vector<8x32xf32>
    %cst_57 = arith.constant dense<0.000000e+00> : vector<8x32xf32>
    %59 = tpu.matmul %57, %56, %cst_57 {dimension_numbers = #tpu.dot_dimension_numbers<[1], [0], [0], [1], [0, 0, 1, 1], [], []>} : vector<8x32xf32>, vector<32x32xf32>, vector<8x32xf32> -> vector<8x32xf32>
    %60 = arith.addf %58, %59 : vector<8x32xf32>
    %61 = math.tanh %60 : vector<8x32xf32>
    %c8_58 = arith.constant 8 : index
    %c0_59 = arith.constant 0 : index
    %62 = vector.load %arg11[%c8_58, %c0_59] : memref<64x32xf32, #tpu.memory_space<vmem>>, vector<8x32xf32>
    %cst_60 = arith.constant dense<0.000000e+00> : vector<8x32xf32>
    %63 = tpu.matmul %61, %56, %cst_60 {dimension_numbers = #tpu.dot_dimension_numbers<[1], [0], [0], [1], [0, 0, 1, 1], [], []>} : vector<8x32xf32>, vector<32x32xf32>, vector<8x32xf32> -> vector<8x32xf32>
    %64 = arith.addf %62, %63 : vector<8x32xf32>
    %65 = math.tanh %64 : vector<8x32xf32>
    %c16_61 = arith.constant 16 : index
    %c0_62 = arith.constant 0 : index
    %66 = vector.load %arg11[%c16_61, %c0_62] : memref<64x32xf32, #tpu.memory_space<vmem>>, vector<8x32xf32>
    %cst_63 = arith.constant dense<0.000000e+00> : vector<8x32xf32>
    %67 = tpu.matmul %65, %56, %cst_63 {dimension_numbers = #tpu.dot_dimension_numbers<[1], [0], [0], [1], [0, 0, 1, 1], [], []>} : vector<8x32xf32>, vector<32x32xf32>, vector<8x32xf32> -> vector<8x32xf32>
    %68 = arith.addf %66, %67 : vector<8x32xf32>
    %69 = math.tanh %68 : vector<8x32xf32>
    %c24_64 = arith.constant 24 : index
    %c0_65 = arith.constant 0 : index
    %70 = vector.load %arg11[%c24_64, %c0_65] : memref<64x32xf32, #tpu.memory_space<vmem>>, vector<8x32xf32>
    %cst_66 = arith.constant dense<0.000000e+00> : vector<8x32xf32>
    %71 = tpu.matmul %69, %56, %cst_66 {dimension_numbers = #tpu.dot_dimension_numbers<[1], [0], [0], [1], [0, 0, 1, 1], [], []>} : vector<8x32xf32>, vector<32x32xf32>, vector<8x32xf32> -> vector<8x32xf32>
    %72 = arith.addf %70, %71 : vector<8x32xf32>
    %73 = math.tanh %72 : vector<8x32xf32>
    %c32_67 = arith.constant 32 : index
    %c0_68 = arith.constant 0 : index
    %74 = vector.load %arg11[%c32_67, %c0_68] : memref<64x32xf32, #tpu.memory_space<vmem>>, vector<8x32xf32>
    %cst_69 = arith.constant dense<0.000000e+00> : vector<8x32xf32>
    %75 = tpu.matmul %73, %56, %cst_69 {dimension_numbers = #tpu.dot_dimension_numbers<[1], [0], [0], [1], [0, 0, 1, 1], [], []>} : vector<8x32xf32>, vector<32x32xf32>, vector<8x32xf32> -> vector<8x32xf32>
    %76 = arith.addf %74, %75 : vector<8x32xf32>
    %77 = math.tanh %76 : vector<8x32xf32>
    %c40_70 = arith.constant 40 : index
    %c0_71 = arith.constant 0 : index
    %78 = vector.load %arg11[%c40_70, %c0_71] : memref<64x32xf32, #tpu.memory_space<vmem>>, vector<8x32xf32>
    %cst_72 = arith.constant dense<0.000000e+00> : vector<8x32xf32>
    %79 = tpu.matmul %77, %56, %cst_72 {dimension_numbers = #tpu.dot_dimension_numbers<[1], [0], [0], [1], [0, 0, 1, 1], [], []>} : vector<8x32xf32>, vector<32x32xf32>, vector<8x32xf32> -> vector<8x32xf32>
    %80 = arith.addf %78, %79 : vector<8x32xf32>
    %81 = math.tanh %80 : vector<8x32xf32>
    %c48_73 = arith.constant 48 : index
    %c0_74 = arith.constant 0 : index
    %82 = vector.load %arg11[%c48_73, %c0_74] : memref<64x32xf32, #tpu.memory_space<vmem>>, vector<8x32xf32>
    %cst_75 = arith.constant dense<0.000000e+00> : vector<8x32xf32>
    %83 = tpu.matmul %81, %56, %cst_75 {dimension_numbers = #tpu.dot_dimension_numbers<[1], [0], [0], [1], [0, 0, 1, 1], [], []>} : vector<8x32xf32>, vector<32x32xf32>, vector<8x32xf32> -> vector<8x32xf32>
    %84 = arith.addf %82, %83 : vector<8x32xf32>
    %85 = math.tanh %84 : vector<8x32xf32>
    %c56_76 = arith.constant 56 : index
    %c0_77 = arith.constant 0 : index
    %86 = vector.load %arg11[%c56_76, %c0_77] : memref<64x32xf32, #tpu.memory_space<vmem>>, vector<8x32xf32>
    %cst_78 = arith.constant dense<0.000000e+00> : vector<8x32xf32>
    %87 = tpu.matmul %85, %56, %cst_78 {dimension_numbers = #tpu.dot_dimension_numbers<[1], [0], [0], [1], [0, 0, 1, 1], [], []>} : vector<8x32xf32>, vector<32x32xf32>, vector<8x32xf32> -> vector<8x32xf32>
    %88 = arith.addf %86, %87 : vector<8x32xf32>
    %89 = math.tanh %88 : vector<8x32xf32>
    %c0_79 = arith.constant 0 : index
    %c0_80 = arith.constant 0 : index
    %90 = vector.load %arg7[%c0_79, %c0_80] : memref<32x1xf32, #tpu.memory_space<vmem>>, vector<32x1xf32>
    %cst_81 = arith.constant dense<0.000000e+00> : vector<8x1xf32>
    %91 = tpu.matmul %89, %90, %cst_81 {dimension_numbers = #tpu.dot_dimension_numbers<[1], [0], [0], [1], [0, 0, 1, 1], [], []>} : vector<8x32xf32>, vector<32x1xf32>, vector<8x1xf32> -> vector<8x1xf32>
    %c0_82 = arith.constant 0 : index
    %c0_83 = arith.constant 0 : index
    %92 = vector.load %arg8[%c0_82, %c0_83] : memref<1x1xf32, #tpu.memory_space<vmem>>, vector<1x1xf32>
    %93 = vector.broadcast %92 : vector<1x1xf32> to vector<8x1xf32>
    %94 = arith.addf %91, %93 : vector<8x1xf32>
    %95 = arith.negf %94 : vector<8x1xf32>
    %96 = math.exp %95 : vector<8x1xf32>
    %cst_84 = arith.constant 1.000000e+00 : f32
    %97 = vector.broadcast %cst_84 : f32 to vector<8x1xf32>
    %98 = arith.addf %97, %96 : vector<8x1xf32>
    %99 = arith.divf %97, %98 : vector<8x1xf32>
    %c0_85 = arith.constant 0 : index
    %c0_86 = arith.constant 0 : index
    %100 = vector.load %arg9[%c0_85, %c0_86] : memref<8x1xf32, #tpu.memory_space<vmem>>, vector<8x1xf32>
    tpu.vector_store %arg9[%c0_85, %c0_86], %99 {strides = array<i32>} : memref<8x1xf32, #tpu.memory_space<vmem>>, vector<8x1xf32>,
    return
  }
}

</mosaic_0001>

<llo_original>
// kernel: tpu_custom_call.1
$region0: #{tpu_custom_call.1}
  #allocation0 [shape = 'u32[]', space=smem, size = 0x4, offset = 0x4, fixed_abs, tag = 'smem constant byte address 0x4 - core index']
  #allocation1 [shape = 'u32[144,128]{1,0:T(1,128)}', space=vmem, size = 0x12000, scoped, tag = 'internal scratch']
  #allocation2 [shape = 'f32[64,32]{1,0:T(8,128)}', space=vmem, size = 0x8000, scoped, tag = 'scratch operand']
  #allocation3 [shape = 'f32[64,32]{1,0:T(8,128)}', space=vmem, size = 0x8000, scoped, tag = 'scratch operand']
  #allocation4 [shape = 'f32[1,1]{1,0:T(1,128)S(1)}', space=vmem, size = 0x200, scoped, tag = 'scoped memory for tpu_custom_call.1']
  %s0 = inlined_call_operand.vmem [shape: f32[64,4], index: 0, kind: input, shape index: {}]
  %s1 = inlined_call_operand.vmem [shape: f32[4,32], index: 1, kind: input, shape index: {}]
  %s2 = inlined_call_operand.vmem [shape: f32[32,32], index: 2, kind: input, shape index: {}]
  %s3 = inlined_call_operand.vmem [shape: f32[1,32], index: 3, kind: input, shape index: {}]
  %s4 = inlined_call_operand.vmem [shape: f32[32,32], index: 4, kind: input, shape index: {}]
  %s5 = inlined_call_operand.vmem [shape: f32[32,32], index: 5, kind: input, shape index: {}]
  %s6 = inlined_call_operand.vmem [shape: f32[1,32], index: 6, kind: input, shape index: {}]
  %s7 = inlined_call_operand.vmem [shape: f32[32,1], index: 7, kind: input, shape index: {}]
  %s8 = inlined_call_operand.<no memory space> [shape: f32[1,1], index: 8, kind: input, shape index: {}]
  %s9 = inlined_call_operand.vmem [shape: f32[8,1], index: 9, kind: output, shape index: {}]
  %s10 = sld [smem:[#allocation0]]
  $region46: #{tpu_custom_call.1} parent=0
    _
  %s12 = ssub.s32 1, %s10
  %s13 = scalar_select 0, %s12, %s10
  %v14 = vstv %s8
  %15 = vst [vmem:[#allocation4] sm:$0x1] %v14
  // Predicated region
  $region2: #{tpu_custom_call.1} parent=0 // pred_check
    _
  $region3: #{tpu_custom_call.1} parent=0 // pred_check_branch
    %17 = sbr.rel (0) target = $region5
  $region4: #{tpu_custom_call.1} parent=0 // pred_region
    _
  $region5: #{tpu_custom_call.1} parent=0 // pred_fallthru
    _
  // Predicated region
  $region6: #{tpu_custom_call.1} parent=0 // pred_check
    _
  $region7: #{tpu_custom_call.1} parent=0 // pred_check_branch
    %19 = sbr.rel (0) target = $region9
  $region8: #{tpu_custom_call.1} parent=0 // pred_region
    _
  $region9: #{tpu_custom_call.1} parent=0 // pred_fallthru
    _
  // Predicated region
  $region10: #{tpu_custom_call.1} parent=0 // pred_check
    _
  $region11: #{tpu_custom_call.1} parent=0 // pred_check_branch
    %21 = sbr.rel (0) target = $region13
  $region12: #{tpu_custom_call.1} parent=0 // pred_region
    _
  $region13: #{tpu_custom_call.1} parent=0 // pred_fallthru
    _
  // Predicated region
  $region14: #{tpu_custom_call.1} parent=0 // pred_check
    _
  $region15: #{tpu_custom_call.1} parent=0 // pred_check_branch
    %23 = sbr.rel (0) target = $region17
  $region16: #{tpu_custom_call.1} parent=0 // pred_region
    _
  $region17: #{tpu_custom_call.1} parent=0 // pred_fallthru
    _
  // Predicated region
  $region18: #{tpu_custom_call.1} parent=0 // pred_check
    _
  $region19: #{tpu_custom_call.1} parent=0 // pred_check_branch
    %25 = sbr.rel (0) target = $region21
  $region20: #{tpu_custom_call.1} parent=0 // pred_region
    _
  $region21: #{tpu_custom_call.1} parent=0 // pred_fallthru
    _
  // Predicated region
  $region22: #{tpu_custom_call.1} parent=0 // pred_check
    _
  $region23: #{tpu_custom_call.1} parent=0 // pred_check_branch
    %27 = sbr.rel (0) target = $region25
  $region24: #{tpu_custom_call.1} parent=0 // pred_region
    _
  $region25: #{tpu_custom_call.1} parent=0 // pred_fallthru
    _
  // Predicated region
  $region26: #{tpu_custom_call.1} parent=0 // pred_check
    _
  $region27: #{tpu_custom_call.1} parent=0 // pred_check_branch
    %29 = sbr.rel (0) target = $region29
  $region28: #{tpu_custom_call.1} parent=0 // pred_region
    _
  $region29: #{tpu_custom_call.1} parent=0 // pred_fallthru
    _
  // Predicated region
  $region30: #{tpu_custom_call.1} parent=0 // pred_check
    _
  $region31: #{tpu_custom_call.1} parent=0 // pred_check_branch
    %31 = sbr.rel (0) target = $region33
  $region32: #{tpu_custom_call.1} parent=0 // pred_region
    _
  $region33: #{tpu_custom_call.1} parent=0 // pred_fallthru
    _
  // Predicated region
  $region34: #{tpu_custom_call.1} parent=0 // pred_check
    _
  $region35: #{tpu_custom_call.1} parent=0 // pred_check_branch
    %33 = sbr.rel (0) target = $region37
  $region36: #{tpu_custom_call.1} parent=0 // pred_region
    _
  $region37: #{tpu_custom_call.1} parent=0 // pred_fallthru
    _
  %v34 = vld [vmem:[%s0] sm:$0xff]
  %v35 = vld [vmem:[%s0 + $0x8] sm:$0xff]
  %v36 = vld [vmem:[%s0 + $0x10] sm:$0xff]
  %v37 = vld [vmem:[%s0 + $0x18] sm:$0xff]
  %v38 = vld [vmem:[%s0 + $0x20] sm:$0xff]
  %v39 = vld [vmem:[%s0 + $0x28] sm:$0xff]
  %v40 = vld [vmem:[%s0 + $0x30] sm:$0xff]
  %v41 = vld [vmem:[%s0 + $0x38] sm:$0xff]
  %v42 = vld [vmem:[%s1] sm:$0xf]
  %v43 = vld [vmem:[%s3] sm:$0x1]
  %v45 = vlaneseq
  %v46 = vshrl.u32 %v45, 7
  %v47 = vsub.s32 0, %v46
  %v48 = vrot.slane %v43, %v47
  %vm50 = vcmask 31744
  %v52 = vsel %vm50, %v34, 0
  %v55 = vsel %vm50, %v35, 0
  %v58 = vsel %vm50, %v36, 0
  %v61 = vsel %vm50, %v37, 0
  %v64 = vsel %vm50, %v38, 0
  %v67 = vsel %vm50, %v39, 0
  %v70 = vsel %vm50, %v40, 0
  %v73 = vsel %vm50, %v41, 0
  %vm75 = vcmask 1043456
  %v77 = vsel %vm75, %v42, 0
  %79 = vmatprep.subr.mxu0 0.0
  %80 = vmatpush1.msra.mxu0 %v77
  %81 = vmatprep.subr.mxu0 0.0
  %82 = vmatpush1.msra.mxu0 0.0
  %83 = vmatprep.subr.mxu0 0.0
  %84 = vmatpush1.msra.mxu0 0.0
  %85 = vmatprep.subr.mxu0 0.0
  %86 = vmatpush1.msra.mxu0 0.0
  %87 = vmatprep.subr.mxu0 0.0
  %88 = vmatpush1.msra.mxu0 0.0
  %89 = vmatprep.subr.mxu0 0.0
  %90 = vmatpush1.msra.mxu0 0.0
  %91 = vmatprep.subr.mxu0 0.0
  %92 = vmatpush1.msra.mxu0 0.0
  %93 = vmatprep.subr.mxu0 0.0
  %94 = vmatpush1.msra.mxu0 0.0
  %95 = vmatprep.subr.mxu0 0.0
  %96 = vmatpush1.msra.mxu0 0.0
  %97 = vmatprep.subr.mxu0 0.0
  %98 = vmatpush1.msra.mxu0 0.0
  %99 = vmatprep.subr.mxu0 0.0
  %100 = vmatpush1.msra.mxu0 0.0
  %101 = vmatprep.subr.mxu0 0.0
  %102 = vmatpush1.msra.mxu0 0.0
  %103 = vmatprep.subr.mxu0 0.0
  %104 = vmatpush1.msra.mxu0 0.0
  %105 = vmatprep.subr.mxu0 0.0
  %106 = vmatpush1.msra.mxu0 0.0
  %107 = vmatprep.subr.mxu0 0.0
  %108 = vmatpush1.msra.mxu0 0.0
  %109 = vmatprep.subr.mxu0 0.0
  %110 = vmatpush1.msra.mxu0 0.0
  %111 = vmatprep.subr.mxu0 0.0
  %112 = vmatpush1.msra.mxu0 0.0
  %113 = vmatprep.subr.mxu0 0.0
  %114 = vmatpush1.msra.mxu0 0.0
  %115 = vmatprep.subr.mxu0 0.0
  %116 = vmatpush1.msra.mxu0 0.0
  %117 = vmatprep.subr.mxu0 0.0
  %118 = vmatpush1.msra.mxu0 0.0
  %119 = vmatprep.subr.mxu0 0.0
  %120 = vmatpush1.msra.mxu0 0.0
  %121 = vmatprep.subr.mxu0 0.0
  %122 = vmatpush1.msra.mxu0 0.0
  %123 = vmatprep.subr.mxu0 0.0
  %124 = vmatpush1.msra.mxu0 0.0
  %125 = vmatprep.subr.mxu0 0.0
  %126 = vmatpush1.msra.mxu0 0.0
  %127 = vmatprep.subr.mxu0 0.0
  %128 = vmatpush1.msra.mxu0 0.0
  %129 = vmatprep.subr.mxu0 0.0
  %130 = vmatpush1.msra.mxu0 0.0
  %131 = vmatprep.subr.mxu0 0.0
  %132 = vmatpush1.msra.mxu0 0.0
  %133 = vmatprep.subr.mxu0 0.0
  %134 = vmatpush1.msra.mxu0 0.0
  %135 = vmatprep.subr.mxu0 0.0
  %136 = vmatpush1.msra.mxu0 0.0
  %137 = vmatprep.subr.mxu0 0.0
  %138 = vmatpush1.msra.mxu0 0.0
  %139 = vmatprep.subr.mxu0 0.0
  %140 = vmatpush1.msra.mxu0 0.0
  %141 = vmatprep.subr.mxu0 0.0
  %142 = vmatpush1.msra.mxu0 0.0
  %143 = vmatprep.mubr.f32.mxu0 0.0
  %144 = vmatmul.mubr.f32.gmra.mrb[0].mxu0 %v52
  %v145 = vpop.f32.mrb[0].mxu0
  %v146 = vadd.f32 %v48, %v145
  %v147 = vpop.f32.mrb[0].mxu0
  %148 = vmatprep.mubr.f32.mxu0 0.0
  %149 = vmatmul.mubr.f32.gmra.mrb[0].mxu0 %v55
  %v150 = vpop.f32.mrb[0].mxu0
  %v151 = vadd.f32 %v48, %v150
  %v152 = vpop.f32.mrb[0].mxu0
  %153 = vmatprep.mubr.f32.mxu0 0.0
  %154 = vmatmul.mubr.f32.gmra.mrb[0].mxu0 %v58
  %v155 = vpop.f32.mrb[0].mxu0
  %v156 = vadd.f32 %v48, %v155
  %v157 = vpop.f32.mrb[0].mxu0
  %158 = vmatprep.mubr.f32.mxu0 0.0
  %159 = vmatmul.mubr.f32.gmra.mrb[0].mxu0 %v61
  %v160 = vpop.f32.mrb[0].mxu0
  %v161 = vadd.f32 %v48, %v160
  %v162 = vpop.f32.mrb[0].mxu0
  %163 = vmatprep.mubr.f32.mxu0 0.0
  %164 = vmatmul.mubr.f32.gmra.mrb[0].mxu0 %v64
  %v165 = vpop.f32.mrb[0].mxu0
  %v166 = vadd.f32 %v48, %v165
  %v167 = vpop.f32.mrb[0].mxu0
  %168 = vmatprep.mubr.f32.mxu0 0.0
  %169 = vmatmul.mubr.f32.gmra.mrb[0].mxu0 %v67
  %v170 = vpop.f32.mrb[0].mxu0
  %v171 = vadd.f32 %v48, %v170
  %v172 = vpop.f32.mrb[0].mxu0
  %173 = vmatprep.mubr.f32.mxu0 0.0
  %174 = vmatmul.mubr.f32.gmra.mrb[0].mxu0 %v70
  %v175 = vpop.f32.mrb[0].mxu0
  %v176 = vadd.f32 %v48, %v175
  %v177 = vpop.f32.mrb[0].mxu0
  %178 = vmatprep.mubr.f32.mxu0 0.0
  %179 = vmatmul.mubr.f32.gmra.mrb[0].mxu0 %v73
  %v180 = vpop.f32.mrb[0].mxu0
  %v181 = vadd.f32 %v48, %v180
  %v182 = vpop.f32.mrb[0].mxu0
  %183 = vdwg.mxu0
  %vm184 = vcmask 261120
  %185 = vst.msk [vmem:[#allocation3] sm:$0xff] %vm184, %v146
  %186 = vst.msk [vmem:[#allocation3 + $0x8] sm:$0xff] %vm184, %v151
  %187 = vst.msk [vmem:[#allocation3 + $0x10] sm:$0xff] %vm184, %v156
  %188 = vst.msk [vmem:[#allocation3 + $0x18] sm:$0xff] %vm184, %v161
  %189 = vst.msk [vmem:[#allocation3 + $0x20] sm:$0xff] %vm184, %v166
  %190 = vst.msk [vmem:[#allocation3 + $0x28] sm:$0xff] %vm184, %v171
  %191 = vst.msk [vmem:[#allocation3 + $0x30] sm:$0xff] %vm184, %v176
  %192 = vst.msk [vmem:[#allocation3 + $0x38] sm:$0xff] %vm184, %v181
  %v193 = vld [vmem:[%s2] sm:$0xff]
  %v194 = vld [vmem:[%s2 + $0x8] sm:$0xff]
  %v195 = vld [vmem:[%s2 + $0x10] sm:$0xff]
  %v196 = vld [vmem:[%s2 + $0x18] sm:$0xff]
  %v197 = vld [vmem:[#allocation3] sm:$0xff]
  %v199 = vsel %vm184, 0.0, 0
  %201 = vmatprep.subr.mxu0 0.0
  %202 = vmatpush1.msra.mxu0 %v193
  %203 = vmatprep.subr.mxu0 0.0
  %204 = vmatpush1.msra.mxu0 %v194
  %205 = vmatprep.subr.mxu0 0.0
  %206 = vmatpush1.msra.mxu0 %v195
  %207 = vmatprep.subr.mxu0 0.0
  %208 = vmatpush1.msra.mxu0 %v196
  %209 = vmatprep.subr.mxu0 0.0
  %210 = vmatpush1.msra.mxu0 0.0
  %211 = vmatprep.subr.mxu0 0.0
  %212 = vmatpush1.msra.mxu0 0.0
  %213 = vmatprep.subr.mxu0 0.0
  %214 = vmatpush1.msra.mxu0 0.0
  %215 = vmatprep.subr.mxu0 0.0
  %216 = vmatpush1.msra.mxu0 0.0
  %217 = vmatprep.subr.mxu0 0.0
  %218 = vmatpush1.msra.mxu0 0.0
  %219 = vmatprep.subr.mxu0 0.0
  %220 = vmatpush1.msra.mxu0 0.0
  %221 = vmatprep.subr.mxu0 0.0
  %222 = vmatpush1.msra.mxu0 0.0
  %223 = vmatprep.subr.mxu0 0.0
  %224 = vmatpush1.msra.mxu0 0.0
  %225 = vmatprep.subr.mxu0 0.0
  %226 = vmatpush1.msra.mxu0 0.0
  %227 = vmatprep.subr.mxu0 0.0
  %228 = vmatpush1.msra.mxu0 0.0
  %229 = vmatprep.subr.mxu0 0.0
  %230 = vmatpush1.msra.mxu0 0.0
  %231 = vmatprep.subr.mxu0 0.0
  %232 = vmatpush1.msra.mxu0 0.0
  %233 = vmatprep.subr.mxu0 0.0
  %234 = vmatpush1.msra.mxu0 0.0
  %235 = vmatprep.subr.mxu0 0.0
  %236 = vmatpush1.msra.mxu0 0.0
  %237 = vmatprep.subr.mxu0 0.0
  %238 = vmatpush1.msra.mxu0 0.0
  %239 = vmatprep.subr.mxu0 0.0
  %240 = vmatpush1.msra.mxu0 0.0
  %241 = vmatprep.subr.mxu0 0.0
  %242 = vmatpush1.msra.mxu0 0.0
  %243 = vmatprep.subr.mxu0 0.0
  %244 = vmatpush1.msra.mxu0 0.0
  %245 = vmatprep.subr.mxu0 0.0
  %246 = vmatpush1.msra.mxu0 0.0
  %247 = vmatprep.subr.mxu0 0.0
  %248 = vmatpush1.msra.mxu0 0.0
  %249 = vmatprep.subr.mxu0 0.0
  %250 = vmatpush1.msra.mxu0 0.0
  %251 = vmatprep.subr.mxu0 0.0
  %252 = vmatpush1.msra.mxu0 0.0
  %253 = vmatprep.subr.mxu0 0.0
  %254 = vmatpush1.msra.mxu0 0.0
  %255 = vmatprep.subr.mxu0 0.0
  %256 = vmatpush1.msra.mxu0 0.0
  %257 = vmatprep.subr.mxu0 0.0
  %258 = vmatpush1.msra.mxu0 0.0
  %259 = vmatprep.subr.mxu0 0.0
  %260 = vmatpush1.msra.mxu0 0.0
  %261 = vmatprep.subr.mxu0 0.0
  %262 = vmatpush1.msra.mxu0 0.0
  %263 = vmatprep.subr.mxu0 0.0
  %264 = vmatpush1.msra.mxu0 0.0
  %265 = vmatprep.mubr.f32.mxu0 0.0
  %266 = vmatmul.mubr.f32.gmra.mrb[0].mxu0 %v199
  %v267 = vpop.f32.mrb[0].mxu0
  %v268 = vadd.f32 0.0, %v267
  %v269 = vpop.f32.mrb[0].mxu0
  %270 = vdwg.mxu0
  %v271 = vadd.f32 %v197, %v268
  %v272 = vtanh.pop %v271
  %273 = vst.msk [vmem:[#allocation2] sm:$0xff] %vm184, %v272
  %v274 = vld [vmem:[#allocation3 + $0x8] sm:$0xff]
  %v276 = vsel %vm184, %v272, 0
  %278 = vmatprep.subr.mxu0 0.0
  %279 = vmatpush1.msra.mxu0 %v193
  %280 = vmatprep.subr.mxu0 0.0
  %281 = vmatpush1.msra.mxu0 %v194
  %282 = vmatprep.subr.mxu0 0.0
  %283 = vmatpush1.msra.mxu0 %v195
  %284 = vmatprep.subr.mxu0 0.0
  %285 = vmatpush1.msra.mxu0 %v196
  %286 = vmatprep.subr.mxu0 0.0
  %287 = vmatpush1.msra.mxu0 0.0
  %288 = vmatprep.subr.mxu0 0.0
  %289 = vmatpush1.msra.mxu0 0.0
  %290 = vmatprep.subr.mxu0 0.0
  %291 = vmatpush1.msra.mxu0 0.0
  %292 = vmatprep.subr.mxu0 0.0
  %293 = vmatpush1.msra.mxu0 0.0
  %294 = vmatprep.subr.mxu0 0.0
  %295 = vmatpush1.msra.mxu0 0.0
  %296 = vmatprep.subr.mxu0 0.0
  %297 = vmatpush1.msra.mxu0 0.0
  %298 = vmatprep.subr.mxu0 0.0
  %299 = vmatpush1.msra.mxu0 0.0
  %300 = vmatprep.subr.mxu0 0.0
  %301 = vmatpush1.msra.mxu0 0.0
  %302 = vmatprep.subr.mxu0 0.0
  %303 = vmatpush1.msra.mxu0 0.0
  %304 = vmatprep.subr.mxu0 0.0
  %305 = vmatpush1.msra.mxu0 0.0
  %306 = vmatprep.subr.mxu0 0.0
  %307 = vmatpush1.msra.mxu0 0.0
  %308 = vmatprep.subr.mxu0 0.0
  %309 = vmatpush1.msra.mxu0 0.0
  %310 = vmatprep.subr.mxu0 0.0
  %311 = vmatpush1.msra.mxu0 0.0
  %312 = vmatprep.subr.mxu0 0.0
  %313 = vmatpush1.msra.mxu0 0.0
  %314 = vmatprep.subr.mxu0 0.0
  %315 = vmatpush1.msra.mxu0 0.0
  %316 = vmatprep.subr.mxu0 0.0
  %317 = vmatpush1.msra.mxu0 0.0
  %318 = vmatprep.subr.mxu0 0.0
  %319 = vmatpush1.msra.mxu0 0.0
  %320 = vmatprep.subr.mxu0 0.0
  %321 = vmatpush1.msra.mxu0 0.0
  %322 = vmatprep.subr.mxu0 0.0
  %323 = vmatpush1.msra.mxu0 0.0
  %324 = vmatprep.subr.mxu0 0.0
  %325 = vmatpush1.msra.mxu0 0.0
  %326 = vmatprep.subr.mxu0 0.0
  %327 = vmatpush1.msra.mxu0 0.0
  %328 = vmatprep.subr.mxu0 0.0
  %329 = vmatpush1.msra.mxu0 0.0
  %330 = vmatprep.subr.mxu0 0.0
  %331 = vmatpush1.msra.mxu0 0.0
  %332 = vmatprep.subr.mxu0 0.0
  %333 = vmatpush1.msra.mxu0 0.0
  %334 = vmatprep.subr.mxu0 0.0
  %335 = vmatpush1.msra.mxu0 0.0
  %336 = vmatprep.subr.mxu0 0.0
  %337 = vmatpush1.msra.mxu0 0.0
  %338 = vmatprep.subr.mxu0 0.0
  %339 = vmatpush1.msra.mxu0 0.0
  %340 = vmatprep.subr.mxu0 0.0
  %341 = vmatpush1.msra.mxu0 0.0
  %342 = vmatprep.mubr.f32.mxu0 0.0
  %343 = vmatmul.mubr.f32.gmra.mrb[0].mxu0 %v276
  %v344 = vpop.f32.mrb[0].mxu0
  %v345 = vadd.f32 0.0, %v344
  %v346 = vpop.f32.mrb[0].mxu0
  %347 = vdwg.mxu0
  %v348 = vadd.f32 %v274, %v345
  %v349 = vtanh.pop %v348
  %350 = vst.msk [vmem:[#allocation2 + $0x8] sm:$0xff] %vm184, %v349
  %v351 = vld [vmem:[#allocation3 + $0x10] sm:$0xff]
  %v353 = vsel %vm184, %v349, 0
  %355 = vmatprep.subr.mxu0 0.0
  %356 = vmatpush1.msra.mxu0 %v193
  %357 = vmatprep.subr.mxu0 0.0
  %358 = vmatpush1.msra.mxu0 %v194
  %359 = vmatprep.subr.mxu0 0.0
  %360 = vmatpush1.msra.mxu0 %v195
  %361 = vmatprep.subr.mxu0 0.0
  %362 = vmatpush1.msra.mxu0 %v196
  %363 = vmatprep.subr.mxu0 0.0
  %364 = vmatpush1.msra.mxu0 0.0
  %365 = vmatprep.subr.mxu0 0.0
  %366 = vmatpush1.msra.mxu0 0.0
  %367 = vmatprep.subr.mxu0 0.0
  %368 = vmatpush1.msra.mxu0 0.0
  %369 = vmatprep.subr.mxu0 0.0
  %370 = vmatpush1.msra.mxu0 0.0
  %371 = vmatprep.subr.mxu0 0.0
  %372 = vmatpush1.msra.mxu0 0.0
  %373 = vmatprep.subr.mxu0 0.0
  %374 = vmatpush1.msra.mxu0 0.0
  %375 = vmatprep.subr.mxu0 0.0
  %376 = vmatpush1.msra.mxu0 0.0
  %377 = vmatprep.subr.mxu0 0.0
  %378 = vmatpush1.msra.mxu0 0.0
  %379 = vmatprep.subr.mxu0 0.0
  %380 = vmatpush1.msra.mxu0 0.0
  %381 = vmatprep.subr.mxu0 0.0
  %382 = vmatpush1.msra.mxu0 0.0
  %383 = vmatprep.subr.mxu0 0.0
  %384 = vmatpush1.msra.mxu0 0.0
  %385 = vmatprep.subr.mxu0 0.0
  %386 = vmatpush1.msra.mxu0 0.0
  %387 = vmatprep.subr.mxu0 0.0
  %388 = vmatpush1.msra.mxu0 0.0
  %389 = vmatprep.subr.mxu0 0.0
  %390 = vmatpush1.msra.mxu0 0.0
  %391 = vmatprep.subr.mxu0 0.0
  %392 = vmatpush1.msra.mxu0 0.0
  %393 = vmatprep.subr.mxu0 0.0
  %394 = vmatpush1.msra.mxu0 0.0
  %395 = vmatprep.subr.mxu0 0.0
  %396 = vmatpush1.msra.mxu0 0.0
  %397 = vmatprep.subr.mxu0 0.0
  %398 = vmatpush1.msra.mxu0 0.0
  %399 = vmatprep.subr.mxu0 0.0
  %400 = vmatpush1.msra.mxu0 0.0
  %401 = vmatprep.subr.mxu0 0.0
  %402 = vmatpush1.msra.mxu0 0.0
  %403 = vmatprep.subr.mxu0 0.0
  %404 = vmatpush1.msra.mxu0 0.0
  %405 = vmatprep.subr.mxu0 0.0
  %406 = vmatpush1.msra.mxu0 0.0
  %407 = vmatprep.subr.mxu0 0.0
  %408 = vmatpush1.msra.mxu0 0.0
  %409 = vmatprep.subr.mxu0 0.0
  %410 = vmatpush1.msra.mxu0 0.0
  %411 = vmatprep.subr.mxu0 0.0
  %412 = vmatpush1.msra.mxu0 0.0
  %413 = vmatprep.subr.mxu0 0.0
  %414 = vmatpush1.msra.mxu0 0.0
  %415 = vmatprep.subr.mxu0 0.0
  %416 = vmatpush1.msra.mxu0 0.0
  %417 = vmatprep.subr.mxu0 0.0
  %418 = vmatpush1.msra.mxu0 0.0
  %419 = vmatprep.mubr.f32.mxu0 0.0
  %420 = vmatmul.mubr.f32.gmra.mrb[0].mxu0 %v353
  %v421 = vpop.f32.mrb[0].mxu0
  %v422 = vadd.f32 0.0, %v421
  %v423 = vpop.f32.mrb[0].mxu0
  %424 = vdwg.mxu0
  %v425 = vadd.f32 %v351, %v422
  %v426 = vtanh.pop %v425
  %427 = vst.msk [vmem:[#allocation2 + $0x10] sm:$0xff] %vm184, %v426
  %v428 = vld [vmem:[#allocation3 + $0x18] sm:$0xff]
  %v430 = vsel %vm184, %v426, 0
  %432 = vmatprep.subr.mxu0 0.0
  %433 = vmatpush1.msra.mxu0 %v193
  %434 = vmatprep.subr.mxu0 0.0
  %435 = vmatpush1.msra.mxu0 %v194
  %436 = vmatprep.subr.mxu0 0.0
  %437 = vmatpush1.msra.mxu0 %v195
  %438 = vmatprep.subr.mxu0 0.0
  %439 = vmatpush1.msra.mxu0 %v196
  %440 = vmatprep.subr.mxu0 0.0
  %441 = vmatpush1.msra.mxu0 0.0
  %442 = vmatprep.subr.mxu0 0.0
  %443 = vmatpush1.msra.mxu0 0.0
  %444 = vmatprep.subr.mxu0 0.0
  %445 = vmatpush1.msra.mxu0 0.0
  %446 = vmatprep.subr.mxu0 0.0
  %447 = vmatpush1.msra.mxu0 0.0
  %448 = vmatprep.subr.mxu0 0.0
  %449 = vmatpush1.msra.mxu0 0.0
  %450 = vmatprep.subr.mxu0 0.0
  %451 = vmatpush1.msra.mxu0 0.0
  %452 = vmatprep.subr.mxu0 0.0
  %453 = vmatpush1.msra.mxu0 0.0
  %454 = vmatprep.subr.mxu0 0.0
  %455 = vmatpush1.msra.mxu0 0.0
  %456 = vmatprep.subr.mxu0 0.0
  %457 = vmatpush1.msra.mxu0 0.0
  %458 = vmatprep.subr.mxu0 0.0
  %459 = vmatpush1.msra.mxu0 0.0
  %460 = vmatprep.subr.mxu0 0.0
  %461 = vmatpush1.msra.mxu0 0.0
  %462 = vmatprep.subr.mxu0 0.0
  %463 = vmatpush1.msra.mxu0 0.0
  %464 = vmatprep.subr.mxu0 0.0
  %465 = vmatpush1.msra.mxu0 0.0
  %466 = vmatprep.subr.mxu0 0.0
  %467 = vmatpush1.msra.mxu0 0.0
  %468 = vmatprep.subr.mxu0 0.0
  %469 = vmatpush1.msra.mxu0 0.0
  %470 = vmatprep.subr.mxu0 0.0
  %471 = vmatpush1.msra.mxu0 0.0
  %472 = vmatprep.subr.mxu0 0.0
  %473 = vmatpush1.msra.mxu0 0.0
  %474 = vmatprep.subr.mxu0 0.0
  %475 = vmatpush1.msra.mxu0 0.0
  %476 = vmatprep.subr.mxu0 0.0
  %477 = vmatpush1.msra.mxu0 0.0
  %478 = vmatprep.subr.mxu0 0.0
  %479 = vmatpush1.msra.mxu0 0.0
  %480 = vmatprep.subr.mxu0 0.0
  %481 = vmatpush1.msra.mxu0 0.0
  %482 = vmatprep.subr.mxu0 0.0
  %483 = vmatpush1.msra.mxu0 0.0
  %484 = vmatprep.subr.mxu0 0.0
  %485 = vmatpush1.msra.mxu0 0.0
  %486 = vmatprep.subr.mxu0 0.0
  %487 = vmatpush1.msra.mxu0 0.0
  %488 = vmatprep.subr.mxu0 0.0
  %489 = vmatpush1.msra.mxu0 0.0
  %490 = vmatprep.subr.mxu0 0.0
  %491 = vmatpush1.msra.mxu0 0.0
  %492 = vmatprep.subr.mxu0 0.0
  %493 = vmatpush1.msra.mxu0 0.0
  %494 = vmatprep.subr.mxu0 0.0
  %495 = vmatpush1.msra.mxu0 0.0
  %496 = vmatprep.mubr.f32.mxu0 0.0
  %497 = vmatmul.mubr.f32.gmra.mrb[0].mxu0 %v430
  %v498 = vpop.f32.mrb[0].mxu0
  %v499 = vadd.f32 0.0, %v498
  %v500 = vpop.f32.mrb[0].mxu0
  %501 = vdwg.mxu0
  %v502 = vadd.f32 %v428, %v499
  %v503 = vtanh.pop %v502
  %504 = vst.msk [vmem:[#allocation2 + $0x18] sm:$0xff] %vm184, %v503
  %v505 = vld [vmem:[#allocation3 + $0x20] sm:$0xff]
  %v507 = vsel %vm184, %v503, 0
  %509 = vmatprep.subr.mxu0 0.0
  %510 = vmatpush1.msra.mxu0 %v193
  %511 = vmatprep.subr.mxu0 0.0
  %512 = vmatpush1.msra.mxu0 %v194
  %513 = vmatprep.subr.mxu0 0.0
  %514 = vmatpush1.msra.mxu0 %v195
  %515 = vmatprep.subr.mxu0 0.0
  %516 = vmatpush1.msra.mxu0 %v196
  %517 = vmatprep.subr.mxu0 0.0
  %518 = vmatpush1.msra.mxu0 0.0
  %519 = vmatprep.subr.mxu0 0.0
  %520 = vmatpush1.msra.mxu0 0.0
  %521 = vmatprep.subr.mxu0 0.0
  %522 = vmatpush1.msra.mxu0 0.0
  %523 = vmatprep.subr.mxu0 0.0
  %524 = vmatpush1.msra.mxu0 0.0
  %525 = vmatprep.subr.mxu0 0.0
  %526 = vmatpush1.msra.mxu0 0.0
  %527 = vmatprep.subr.mxu0 0.0
  %528 = vmatpush1.msra.mxu0 0.0
  %529 = vmatprep.subr.mxu0 0.0
  %530 = vmatpush1.msra.mxu0 0.0
  %531 = vmatprep.subr.mxu0 0.0
  %532 = vmatpush1.msra.mxu0 0.0
  %533 = vmatprep.subr.mxu0 0.0
  %534 = vmatpush1.msra.mxu0 0.0
  %535 = vmatprep.subr.mxu0 0.0
  %536 = vmatpush1.msra.mxu0 0.0
  %537 = vmatprep.subr.mxu0 0.0
  %538 = vmatpush1.msra.mxu0 0.0
  %539 = vmatprep.subr.mxu0 0.0
  %540 = vmatpush1.msra.mxu0 0.0
  %541 = vmatprep.subr.mxu0 0.0
  %542 = vmatpush1.msra.mxu0 0.0
  %543 = vmatprep.subr.mxu0 0.0
  %544 = vmatpush1.msra.mxu0 0.0
  %545 = vmatprep.subr.mxu0 0.0
  %546 = vmatpush1.msra.mxu0 0.0
  %547 = vmatprep.subr.mxu0 0.0
  %548 = vmatpush1.msra.mxu0 0.0
  %549 = vmatprep.subr.mxu0 0.0
  %550 = vmatpush1.msra.mxu0 0.0
  %551 = vmatprep.subr.mxu0 0.0
  %552 = vmatpush1.msra.mxu0 0.0
  %553 = vmatprep.subr.mxu0 0.0
  %554 = vmatpush1.msra.mxu0 0.0
  %555 = vmatprep.subr.mxu0 0.0
  %556 = vmatpush1.msra.mxu0 0.0
  %557 = vmatprep.subr.mxu0 0.0
  %558 = vmatpush1.msra.mxu0 0.0
  %559 = vmatprep.subr.mxu0 0.0
  %560 = vmatpush1.msra.mxu0 0.0
  %561 = vmatprep.subr.mxu0 0.0
  %562 = vmatpush1.msra.mxu0 0.0
  %563 = vmatprep.subr.mxu0 0.0
  %564 = vmatpush1.msra.mxu0 0.0
  %565 = vmatprep.subr.mxu0 0.0
  %566 = vmatpush1.msra.mxu0 0.0
  %567 = vmatprep.subr.mxu0 0.0
  %568 = vmatpush1.msra.mxu0 0.0
  %569 = vmatprep.subr.mxu0 0.0
  %570 = vmatpush1.msra.mxu0 0.0
  %571 = vmatprep.subr.mxu0 0.0
  %572 = vmatpush1.msra.mxu0 0.0
  %573 = vmatprep.mubr.f32.mxu0 0.0
  %574 = vmatmul.mubr.f32.gmra.mrb[0].mxu0 %v507
  %v575 = vpop.f32.mrb[0].mxu0
  %v576 = vadd.f32 0.0, %v575
  %v577 = vpop.f32.mrb[0].mxu0
  %578 = vdwg.mxu0
  %v579 = vadd.f32 %v505, %v576
  %v580 = vtanh.pop %v579
  %581 = vst.msk [vmem:[#allocation2 + $0x20] sm:$0xff] %vm184, %v580
  %v582 = vld [vmem:[#allocation3 + $0x28] sm:$0xff]
  %v584 = vsel %vm184, %v580, 0
  %586 = vmatprep.subr.mxu0 0.0
  %587 = vmatpush1.msra.mxu0 %v193
  %588 = vmatprep.subr.mxu0 0.0
  %589 = vmatpush1.msra.mxu0 %v194
  %590 = vmatprep.subr.mxu0 0.0
  %591 = vmatpush1.msra.mxu0 %v195
  %592 = vmatprep.subr.mxu0 0.0
  %593 = vmatpush1.msra.mxu0 %v196
  %594 = vmatprep.subr.mxu0 0.0
  %595 = vmatpush1.msra.mxu0 0.0
  %596 = vmatprep.subr.mxu0 0.0
  %597 = vmatpush1.msra.mxu0 0.0
  %598 = vmatprep.subr.mxu0 0.0
  %599 = vmatpush1.msra.mxu0 0.0
  %600 = vmatprep.subr.mxu0 0.0
  %601 = vmatpush1.msra.mxu0 0.0
  %602 = vmatprep.subr.mxu0 0.0
  %603 = vmatpush1.msra.mxu0 0.0
  %604 = vmatprep.subr.mxu0 0.0
  %605 = vmatpush1.msra.mxu0 0.0
  %606 = vmatprep.subr.mxu0 0.0
  %607 = vmatpush1.msra.mxu0 0.0
  %608 = vmatprep.subr.mxu0 0.0
  %609 = vmatpush1.msra.mxu0 0.0
  %610 = vmatprep.subr.mxu0 0.0
  %611 = vmatpush1.msra.mxu0 0.0
  %612 = vmatprep.subr.mxu0 0.0
  %613 = vmatpush1.msra.mxu0 0.0
  %614 = vmatprep.subr.mxu0 0.0
  %615 = vmatpush1.msra.mxu0 0.0
  %616 = vmatprep.subr.mxu0 0.0
  %617 = vmatpush1.msra.mxu0 0.0
  %618 = vmatprep.subr.mxu0 0.0
  %619 = vmatpush1.msra.mxu0 0.0
  %620 = vmatprep.subr.mxu0 0.0
  %621 = vmatpush1.msra.mxu0 0.0
  %622 = vmatprep.subr.mxu0 0.0
  %623 = vmatpush1.msra.mxu0 0.0
  %624 = vmatprep.subr.mxu0 0.0
  %625 = vmatpush1.msra.mxu0 0.0
  %626 = vmatprep.subr.mxu0 0.0
  %627 = vmatpush1.msra.mxu0 0.0
  %628 = vmatprep.subr.mxu0 0.0
  %629 = vmatpush1.msra.mxu0 0.0
  %630 = vmatprep.subr.mxu0 0.0
  %631 = vmatpush1.msra.mxu0 0.0
  %632 = vmatprep.subr.mxu0 0.0
  %633 = vmatpush1.msra.mxu0 0.0
  %634 = vmatprep.subr.mxu0 0.0
  %635 = vmatpush1.msra.mxu0 0.0
  %636 = vmatprep.subr.mxu0 0.0
  %637 = vmatpush1.msra.mxu0 0.0
  %638 = vmatprep.subr.mxu0 0.0
  %639 = vmatpush1.msra.mxu0 0.0
  %640 = vmatprep.subr.mxu0 0.0
  %641 = vmatpush1.msra.mxu0 0.0
  %642 = vmatprep.subr.mxu0 0.0
  %643 = vmatpush1.msra.mxu0 0.0
  %644 = vmatprep.subr.mxu0 0.0
  %645 = vmatpush1.msra.mxu0 0.0
  %646 = vmatprep.subr.mxu0 0.0
  %647 = vmatpush1.msra.mxu0 0.0
  %648 = vmatprep.subr.mxu0 0.0
  %649 = vmatpush1.msra.mxu0 0.0
  %650 = vmatprep.mubr.f32.mxu0 0.0
  %651 = vmatmul.mubr.f32.gmra.mrb[0].mxu0 %v584
  %v652 = vpop.f32.mrb[0].mxu0
  %v653 = vadd.f32 0.0, %v652
  %v654 = vpop.f32.mrb[0].mxu0
  %655 = vdwg.mxu0
  %v656 = vadd.f32 %v582, %v653
  %v657 = vtanh.pop %v656
  %658 = vst.msk [vmem:[#allocation2 + $0x28] sm:$0xff] %vm184, %v657
  %v659 = vld [vmem:[#allocation3 + $0x30] sm:$0xff]
  %v661 = vsel %vm184, %v657, 0
  %663 = vmatprep.subr.mxu0 0.0
  %664 = vmatpush1.msra.mxu0 %v193
  %665 = vmatprep.subr.mxu0 0.0
  %666 = vmatpush1.msra.mxu0 %v194
  %667 = vmatprep.subr.mxu0 0.0
  %668 = vmatpush1.msra.mxu0 %v195
  %669 = vmatprep.subr.mxu0 0.0
  %670 = vmatpush1.msra.mxu0 %v196
  %671 = vmatprep.subr.mxu0 0.0
  %672 = vmatpush1.msra.mxu0 0.0
  %673 = vmatprep.subr.mxu0 0.0
  %674 = vmatpush1.msra.mxu0 0.0
  %675 = vmatprep.subr.mxu0 0.0
  %676 = vmatpush1.msra.mxu0 0.0
  %677 = vmatprep.subr.mxu0 0.0
  %678 = vmatpush1.msra.mxu0 0.0
  %679 = vmatprep.subr.mxu0 0.0
  %680 = vmatpush1.msra.mxu0 0.0
  %681 = vmatprep.subr.mxu0 0.0
  %682 = vmatpush1.msra.mxu0 0.0
  %683 = vmatprep.subr.mxu0 0.0
  %684 = vmatpush1.msra.mxu0 0.0
  %685 = vmatprep.subr.mxu0 0.0
  %686 = vmatpush1.msra.mxu0 0.0
  %687 = vmatprep.subr.mxu0 0.0
  %688 = vmatpush1.msra.mxu0 0.0
  %689 = vmatprep.subr.mxu0 0.0
  %690 = vmatpush1.msra.mxu0 0.0
  %691 = vmatprep.subr.mxu0 0.0
  %692 = vmatpush1.msra.mxu0 0.0
  %693 = vmatprep.subr.mxu0 0.0
  %694 = vmatpush1.msra.mxu0 0.0
  %695 = vmatprep.subr.mxu0 0.0
  %696 = vmatpush1.msra.mxu0 0.0
  %697 = vmatprep.subr.mxu0 0.0
  %698 = vmatpush1.msra.mxu0 0.0
  %699 = vmatprep.subr.mxu0 0.0
  %700 = vmatpush1.msra.mxu0 0.0
  %701 = vmatprep.subr.mxu0 0.0
  %702 = vmatpush1.msra.mxu0 0.0
  %703 = vmatprep.subr.mxu0 0.0
  %704 = vmatpush1.msra.mxu0 0.0
  %705 = vmatprep.subr.mxu0 0.0
  %706 = vmatpush1.msra.mxu0 0.0
  %707 = vmatprep.subr.mxu0 0.0
  %708 = vmatpush1.msra.mxu0 0.0
  %709 = vmatprep.subr.mxu0 0.0
  %710 = vmatpush1.msra.mxu0 0.0
  %711 = vmatprep.subr.mxu0 0.0
  %712 = vmatpush1.msra.mxu0 0.0
  %713 = vmatprep.subr.mxu0 0.0
  %714 = vmatpush1.msra.mxu0 0.0
  %715 = vmatprep.subr.mxu0 0.0
  %716 = vmatpush1.msra.mxu0 0.0
  %717 = vmatprep.subr.mxu0 0.0
  %718 = vmatpush1.msra.mxu0 0.0
  %719 = vmatprep.subr.mxu0 0.0
  %720 = vmatpush1.msra.mxu0 0.0
  %721 = vmatprep.subr.mxu0 0.0
  %722 = vmatpush1.msra.mxu0 0.0
  %723 = vmatprep.subr.mxu0 0.0
  %724 = vmatpush1.msra.mxu0 0.0
  %725 = vmatprep.subr.mxu0 0.0
  %726 = vmatpush1.msra.mxu0 0.0
  %727 = vmatprep.mubr.f32.mxu0 0.0
  %728 = vmatmul.mubr.f32.gmra.mrb[0].mxu0 %v661
  %v729 = vpop.f32.mrb[0].mxu0
  %v730 = vadd.f32 0.0, %v729
  %v731 = vpop.f32.mrb[0].mxu0
  %732 = vdwg.mxu0
  %v733 = vadd.f32 %v659, %v730
  %v734 = vtanh.pop %v733
  %735 = vst.msk [vmem:[#allocation2 + $0x30] sm:$0xff] %vm184, %v734
  %v736 = vld [vmem:[#allocation3 + $0x38] sm:$0xff]
  %v738 = vsel %vm184, %v734, 0
  %740 = vmatprep.subr.mxu0 0.0
  %741 = vmatpush1.msra.mxu0 %v193
  %742 = vmatprep.subr.mxu0 0.0
  %743 = vmatpush1.msra.mxu0 %v194
  %744 = vmatprep.subr.mxu0 0.0
  %745 = vmatpush1.msra.mxu0 %v195
  %746 = vmatprep.subr.mxu0 0.0
  %747 = vmatpush1.msra.mxu0 %v196
  %748 = vmatprep.subr.mxu0 0.0
  %749 = vmatpush1.msra.mxu0 0.0
  %750 = vmatprep.subr.mxu0 0.0
  %751 = vmatpush1.msra.mxu0 0.0
  %752 = vmatprep.subr.mxu0 0.0
  %753 = vmatpush1.msra.mxu0 0.0
  %754 = vmatprep.subr.mxu0 0.0
  %755 = vmatpush1.msra.mxu0 0.0
  %756 = vmatprep.subr.mxu0 0.0
  %757 = vmatpush1.msra.mxu0 0.0
  %758 = vmatprep.subr.mxu0 0.0
  %759 = vmatpush1.msra.mxu0 0.0
  %760 = vmatprep.subr.mxu0 0.0
  %761 = vmatpush1.msra.mxu0 0.0
  %762 = vmatprep.subr.mxu0 0.0
  %763 = vmatpush1.msra.mxu0 0.0
  %764 = vmatprep.subr.mxu0 0.0
  %765 = vmatpush1.msra.mxu0 0.0
  %766 = vmatprep.subr.mxu0 0.0
  %767 = vmatpush1.msra.mxu0 0.0
  %768 = vmatprep.subr.mxu0 0.0
  %769 = vmatpush1.msra.mxu0 0.0
  %770 = vmatprep.subr.mxu0 0.0
  %771 = vmatpush1.msra.mxu0 0.0
  %772 = vmatprep.subr.mxu0 0.0
  %773 = vmatpush1.msra.mxu0 0.0
  %774 = vmatprep.subr.mxu0 0.0
  %775 = vmatpush1.msra.mxu0 0.0
  %776 = vmatprep.subr.mxu0 0.0
  %777 = vmatpush1.msra.mxu0 0.0
  %778 = vmatprep.subr.mxu0 0.0
  %779 = vmatpush1.msra.mxu0 0.0
  %780 = vmatprep.subr.mxu0 0.0
  %781 = vmatpush1.msra.mxu0 0.0
  %782 = vmatprep.subr.mxu0 0.0
  %783 = vmatpush1.msra.mxu0 0.0
  %784 = vmatprep.subr.mxu0 0.0
  %785 = vmatpush1.msra.mxu0 0.0
  %786 = vmatprep.subr.mxu0 0.0
  %787 = vmatpush1.msra.mxu0 0.0
  %788 = vmatprep.subr.mxu0 0.0
  %789 = vmatpush1.msra.mxu0 0.0
  %790 = vmatprep.subr.mxu0 0.0
  %791 = vmatpush1.msra.mxu0 0.0
  %792 = vmatprep.subr.mxu0 0.0
  %793 = vmatpush1.msra.mxu0 0.0
  %794 = vmatprep.subr.mxu0 0.0
  %795 = vmatpush1.msra.mxu0 0.0
  %796 = vmatprep.subr.mxu0 0.0
  %797 = vmatpush1.msra.mxu0 0.0
  %798 = vmatprep.subr.mxu0 0.0
  %799 = vmatpush1.msra.mxu0 0.0
  %800 = vmatprep.subr.mxu0 0.0
  %801 = vmatpush1.msra.mxu0 0.0
  %802 = vmatprep.subr.mxu0 0.0
  %803 = vmatpush1.msra.mxu0 0.0
  %804 = vmatprep.mubr.f32.mxu0 0.0
  %805 = vmatmul.mubr.f32.gmra.mrb[0].mxu0 %v738
  %v806 = vpop.f32.mrb[0].mxu0
  %v807 = vadd.f32 0.0, %v806
  %v808 = vpop.f32.mrb[0].mxu0
  %809 = vdwg.mxu0
  %v810 = vadd.f32 %v736, %v807
  %v811 = vtanh.pop %v810
  %812 = vst.msk [vmem:[#allocation2 + $0x38] sm:$0xff] %vm184, %v811
  %v813 = vld [vmem:[#allocation2] sm:$0xff]
  %v814 = vld [vmem:[#allocation2 + $0x8] sm:$0xff]
  %v815 = vld [vmem:[#allocation2 + $0x10] sm:$0xff]
  %v816 = vld [vmem:[#allocation2 + $0x18] sm:$0xff]
  %v817 = vld [vmem:[#allocation2 + $0x20] sm:$0xff]
  %v818 = vld [vmem:[#allocation2 + $0x28] sm:$0xff]
  %v819 = vld [vmem:[#allocation2 + $0x30] sm:$0xff]
  %v820 = vld [vmem:[#allocation2 + $0x38] sm:$0xff]
  %v821 = vld [vmem:[%s4] sm:$0xff]
  %v822 = vld [vmem:[%s4 + $0x8] sm:$0xff]
  %v823 = vld [vmem:[%s4 + $0x10] sm:$0xff]
  %v824 = vld [vmem:[%s4 + $0x18] sm:$0xff]
  %v825 = vld [vmem:[%s6] sm:$0x1]
  %v827 = vlaneseq
  %v828 = vshrl.u32 %v827, 7
  %v829 = vsub.s32 0, %v828
  %v830 = vrot.slane %v825, %v829
  %v833 = vsel %vm184, %v813, 0
  %v836 = vsel %vm184, %v814, 0
  %v839 = vsel %vm184, %v815, 0
  %v842 = vsel %vm184, %v816, 0
  %v845 = vsel %vm184, %v817, 0
  %v848 = vsel %vm184, %v818, 0
  %v851 = vsel %vm184, %v819, 0
  %v854 = vsel %vm184, %v820, 0
  %856 = vmatprep.subr.mxu0 0.0
  %857 = vmatpush1.msra.mxu0 %v821
  %858 = vmatprep.subr.mxu0 0.0
  %859 = vmatpush1.msra.mxu0 %v822
  %860 = vmatprep.subr.mxu0 0.0
  %861 = vmatpush1.msra.mxu0 %v823
  %862 = vmatprep.subr.mxu0 0.0
  %863 = vmatpush1.msra.mxu0 %v824
  %864 = vmatprep.subr.mxu0 0.0
  %865 = vmatpush1.msra.mxu0 0.0
  %866 = vmatprep.subr.mxu0 0.0
  %867 = vmatpush1.msra.mxu0 0.0
  %868 = vmatprep.subr.mxu0 0.0
  %869 = vmatpush1.msra.mxu0 0.0
  %870 = vmatprep.subr.mxu0 0.0
  %871 = vmatpush1.msra.mxu0 0.0
  %872 = vmatprep.subr.mxu0 0.0
  %873 = vmatpush1.msra.mxu0 0.0
  %874 = vmatprep.subr.mxu0 0.0
  %875 = vmatpush1.msra.mxu0 0.0
  %876 = vmatprep.subr.mxu0 0.0
  %877 = vmatpush1.msra.mxu0 0.0
  %878 = vmatprep.subr.mxu0 0.0
  %879 = vmatpush1.msra.mxu0 0.0
  %880 = vmatprep.subr.mxu0 0.0
  %881 = vmatpush1.msra.mxu0 0.0
  %882 = vmatprep.subr.mxu0 0.0
  %883 = vmatpush1.msra.mxu0 0.0
  %884 = vmatprep.subr.mxu0 0.0
  %885 = vmatpush1.msra.mxu0 0.0
  %886 = vmatprep.subr.mxu0 0.0
  %887 = vmatpush1.msra.mxu0 0.0
  %888 = vmatprep.subr.mxu0 0.0
  %889 = vmatpush1.msra.mxu0 0.0
  %890 = vmatprep.subr.mxu0 0.0
  %891 = vmatpush1.msra.mxu0 0.0
  %892 = vmatprep.subr.mxu0 0.0
  %893 = vmatpush1.msra.mxu0 0.0
  %894 = vmatprep.subr.mxu0 0.0
  %895 = vmatpush1.msra.mxu0 0.0
  %896 = vmatprep.subr.mxu0 0.0
  %897 = vmatpush1.msra.mxu0 0.0
  %898 = vmatprep.subr.mxu0 0.0
  %899 = vmatpush1.msra.mxu0 0.0
  %900 = vmatprep.subr.mxu0 0.0
  %901 = vmatpush1.msra.mxu0 0.0
  %902 = vmatprep.subr.mxu0 0.0
  %903 = vmatpush1.msra.mxu0 0.0
  %904 = vmatprep.subr.mxu0 0.0
  %905 = vmatpush1.msra.mxu0 0.0
  %906 = vmatprep.subr.mxu0 0.0
  %907 = vmatpush1.msra.mxu0 0.0
  %908 = vmatprep.subr.mxu0 0.0
  %909 = vmatpush1.msra.mxu0 0.0
  %910 = vmatprep.subr.mxu0 0.0
  %911 = vmatpush1.msra.mxu0 0.0
  %912 = vmatprep.subr.mxu0 0.0
  %913 = vmatpush1.msra.mxu0 0.0
  %914 = vmatprep.subr.mxu0 0.0
  %915 = vmatpush1.msra.mxu0 0.0
  %916 = vmatprep.subr.mxu0 0.0
  %917 = vmatpush1.msra.mxu0 0.0
  %918 = vmatprep.subr.mxu0 0.0
  %919 = vmatpush1.msra.mxu0 0.0
  %920 = vmatprep.mubr.f32.mxu0 0.0
  %921 = vmatmul.mubr.f32.gmra.mrb[0].mxu0 %v833
  %v922 = vpop.f32.mrb[0].mxu0
  %v923 = vadd.f32 %v830, %v922
  %v924 = vpop.f32.mrb[0].mxu0
  %925 = vmatprep.mubr.f32.mxu0 0.0
  %926 = vmatmul.mubr.f32.gmra.mrb[0].mxu0 %v836
  %v927 = vpop.f32.mrb[0].mxu0
  %v928 = vadd.f32 %v830, %v927
  %v929 = vpop.f32.mrb[0].mxu0
  %930 = vmatprep.mubr.f32.mxu0 0.0
  %931 = vmatmul.mubr.f32.gmra.mrb[0].mxu0 %v839
  %v932 = vpop.f32.mrb[0].mxu0
  %v933 = vadd.f32 %v830, %v932
  %v934 = vpop.f32.mrb[0].mxu0
  %935 = vmatprep.mubr.f32.mxu0 0.0
  %936 = vmatmul.mubr.f32.gmra.mrb[0].mxu0 %v842
  %v937 = vpop.f32.mrb[0].mxu0
  %v938 = vadd.f32 %v830, %v937
  %v939 = vpop.f32.mrb[0].mxu0
  %940 = vmatprep.mubr.f32.mxu0 0.0
  %941 = vmatmul.mubr.f32.gmra.mrb[0].mxu0 %v845
  %v942 = vpop.f32.mrb[0].mxu0
  %v943 = vadd.f32 %v830, %v942
  %v944 = vpop.f32.mrb[0].mxu0
  %945 = vmatprep.mubr.f32.mxu0 0.0
  %946 = vmatmul.mubr.f32.gmra.mrb[0].mxu0 %v848
  %v947 = vpop.f32.mrb[0].mxu0
  %v948 = vadd.f32 %v830, %v947
  %v949 = vpop.f32.mrb[0].mxu0
  %950 = vmatprep.mubr.f32.mxu0 0.0
  %951 = vmatmul.mubr.f32.gmra.mrb[0].mxu0 %v851
  %v952 = vpop.f32.mrb[0].mxu0
  %v953 = vadd.f32 %v830, %v952
  %v954 = vpop.f32.mrb[0].mxu0
  %955 = vmatprep.mubr.f32.mxu0 0.0
  %956 = vmatmul.mubr.f32.gmra.mrb[0].mxu0 %v854
  %v957 = vpop.f32.mrb[0].mxu0
  %v958 = vadd.f32 %v830, %v957
  %v959 = vpop.f32.mrb[0].mxu0
  %960 = vdwg.mxu0
  %961 = vst.msk [vmem:[#allocation3] sm:$0xff] %vm184, %v923
  %962 = vst.msk [vmem:[#allocation3 + $0x8] sm:$0xff] %vm184, %v928
  %963 = vst.msk [vmem:[#allocation3 + $0x10] sm:$0xff] %vm184, %v933
  %964 = vst.msk [vmem:[#allocation3 + $0x18] sm:$0xff] %vm184, %v938
  %965 = vst.msk [vmem:[#allocation3 + $0x20] sm:$0xff] %vm184, %v943
  %966 = vst.msk [vmem:[#allocation3 + $0x28] sm:$0xff] %vm184, %v948
  %967 = vst.msk [vmem:[#allocation3 + $0x30] sm:$0xff] %vm184, %v953
  %968 = vst.msk [vmem:[#allocation3 + $0x38] sm:$0xff] %vm184, %v958
  %v969 = vld [vmem:[%s5] sm:$0xff]
  %v970 = vld [vmem:[%s5 + $0x8] sm:$0xff]
  %v971 = vld [vmem:[%s5 + $0x10] sm:$0xff]
  %v972 = vld [vmem:[%s5 + $0x18] sm:$0xff]
  %v973 = vld [vmem:[#allocation3] sm:$0xff]
  %974 = vmatprep.subr.mxu0 0.0
  %975 = vmatpush1.msra.mxu0 %v969
  %976 = vmatprep.subr.mxu0 0.0
  %977 = vmatpush1.msra.mxu0 %v970
  %978 = vmatprep.subr.mxu0 0.0
  %979 = vmatpush1.msra.mxu0 %v971
  %980 = vmatprep.subr.mxu0 0.0
  %981 = vmatpush1.msra.mxu0 %v972
  %982 = vmatprep.subr.mxu0 0.0
  %983 = vmatpush1.msra.mxu0 0.0
  %984 = vmatprep.subr.mxu0 0.0
  %985 = vmatpush1.msra.mxu0 0.0
  %986 = vmatprep.subr.mxu0 0.0
  %987 = vmatpush1.msra.mxu0 0.0
  %988 = vmatprep.subr.mxu0 0.0
  %989 = vmatpush1.msra.mxu0 0.0
  %990 = vmatprep.subr.mxu0 0.0
  %991 = vmatpush1.msra.mxu0 0.0
  %992 = vmatprep.subr.mxu0 0.0
  %993 = vmatpush1.msra.mxu0 0.0
  %994 = vmatprep.subr.mxu0 0.0
  %995 = vmatpush1.msra.mxu0 0.0
  %996 = vmatprep.subr.mxu0 0.0
  %997 = vmatpush1.msra.mxu0 0.0
  %998 = vmatprep.subr.mxu0 0.0
  %999 = vmatpush1.msra.mxu0 0.0
  %1000 = vmatprep.subr.mxu0 0.0
  %1001 = vmatpush1.msra.mxu0 0.0
  %1002 = vmatprep.subr.mxu0 0.0
  %1003 = vmatpush1.msra.mxu0 0.0
  %1004 = vmatprep.subr.mxu0 0.0
  %1005 = vmatpush1.msra.mxu0 0.0
  %1006 = vmatprep.subr.mxu0 0.0
  %1007 = vmatpush1.msra.mxu0 0.0
  %1008 = vmatprep.subr.mxu0 0.0
  %1009 = vmatpush1.msra.mxu0 0.0
  %1010 = vmatprep.subr.mxu0 0.0
  %1011 = vmatpush1.msra.mxu0 0.0
  %1012 = vmatprep.subr.mxu0 0.0
  %1013 = vmatpush1.msra.mxu0 0.0
  %1014 = vmatprep.subr.mxu0 0.0
  %1015 = vmatpush1.msra.mxu0 0.0
  %1016 = vmatprep.subr.mxu0 0.0
  %1017 = vmatpush1.msra.mxu0 0.0
  %1018 = vmatprep.subr.mxu0 0.0
  %1019 = vmatpush1.msra.mxu0 0.0
  %1020 = vmatprep.subr.mxu0 0.0
  %1021 = vmatpush1.msra.mxu0 0.0
  %1022 = vmatprep.subr.mxu0 0.0
  %1023 = vmatpush1.msra.mxu0 0.0
  %1024 = vmatprep.subr.mxu0 0.0
  %1025 = vmatpush1.msra.mxu0 0.0
  %1026 = vmatprep.subr.mxu0 0.0
  %1027 = vmatpush1.msra.mxu0 0.0
  %1028 = vmatprep.subr.mxu0 0.0
  %1029 = vmatpush1.msra.mxu0 0.0
  %1030 = vmatprep.subr.mxu0 0.0
  %1031 = vmatpush1.msra.mxu0 0.0
  %1032 = vmatprep.subr.mxu0 0.0
  %1033 = vmatpush1.msra.mxu0 0.0
  %1034 = vmatprep.subr.mxu0 0.0
  %1035 = vmatpush1.msra.mxu0 0.0
  %1036 = vmatprep.subr.mxu0 0.0
  %1037 = vmatpush1.msra.mxu0 0.0
  %1038 = vmatprep.mubr.f32.mxu0 0.0
  %1039 = vmatmul.mubr.f32.gmra.mrb[0].mxu0 %v199
  %v1040 = vpop.f32.mrb[0].mxu0
  %v1041 = vadd.f32 0.0, %v1040
  %v1042 = vpop.f32.mrb[0].mxu0
  %1043 = vdwg.mxu0
  %v1044 = vadd.f32 %v973, %v1041
  %v1045 = vtanh.pop %v1044
  %v1046 = vld [vmem:[#allocation3 + $0x8] sm:$0xff]
  %v1048 = vsel %vm184, %v1045, 0
  %1050 = vmatprep.subr.mxu0 0.0
  %1051 = vmatpush1.msra.mxu0 %v969
  %1052 = vmatprep.subr.mxu0 0.0
  %1053 = vmatpush1.msra.mxu0 %v970
  %1054 = vmatprep.subr.mxu0 0.0
  %1055 = vmatpush1.msra.mxu0 %v971
  %1056 = vmatprep.subr.mxu0 0.0
  %1057 = vmatpush1.msra.mxu0 %v972
  %1058 = vmatprep.subr.mxu0 0.0
  %1059 = vmatpush1.msra.mxu0 0.0
  %1060 = vmatprep.subr.mxu0 0.0
  %1061 = vmatpush1.msra.mxu0 0.0
  %1062 = vmatprep.subr.mxu0 0.0
  %1063 = vmatpush1.msra.mxu0 0.0
  %1064 = vmatprep.subr.mxu0 0.0
  %1065 = vmatpush1.msra.mxu0 0.0
  %1066 = vmatprep.subr.mxu0 0.0
  %1067 = vmatpush1.msra.mxu0 0.0
  %1068 = vmatprep.subr.mxu0 0.0
  %1069 = vmatpush1.msra.mxu0 0.0
  %1070 = vmatprep.subr.mxu0 0.0
  %1071 = vmatpush1.msra.mxu0 0.0
  %1072 = vmatprep.subr.mxu0 0.0
  %1073 = vmatpush1.msra.mxu0 0.0
  %1074 = vmatprep.subr.mxu0 0.0
  %1075 = vmatpush1.msra.mxu0 0.0
  %1076 = vmatprep.subr.mxu0 0.0
  %1077 = vmatpush1.msra.mxu0 0.0
  %1078 = vmatprep.subr.mxu0 0.0
  %1079 = vmatpush1.msra.mxu0 0.0
  %1080 = vmatprep.subr.mxu0 0.0
  %1081 = vmatpush1.msra.mxu0 0.0
  %1082 = vmatprep.subr.mxu0 0.0
  %1083 = vmatpush1.msra.mxu0 0.0
  %1084 = vmatprep.subr.mxu0 0.0
  %1085 = vmatpush1.msra.mxu0 0.0
  %1086 = vmatprep.subr.mxu0 0.0
  %1087 = vmatpush1.msra.mxu0 0.0
  %1088 = vmatprep.subr.mxu0 0.0
  %1089 = vmatpush1.msra.mxu0 0.0
  %1090 = vmatprep.subr.mxu0 0.0
  %1091 = vmatpush1.msra.mxu0 0.0
  %1092 = vmatprep.subr.mxu0 0.0
  %1093 = vmatpush1.msra.mxu0 0.0
  %1094 = vmatprep.subr.mxu0 0.0
  %1095 = vmatpush1.msra.mxu0 0.0
  %1096 = vmatprep.subr.mxu0 0.0
  %1097 = vmatpush1.msra.mxu0 0.0
  %1098 = vmatprep.subr.mxu0 0.0
  %1099 = vmatpush1.msra.mxu0 0.0
  %1100 = vmatprep.subr.mxu0 0.0
  %1101 = vmatpush1.msra.mxu0 0.0
  %1102 = vmatprep.subr.mxu0 0.0
  %1103 = vmatpush1.msra.mxu0 0.0
  %1104 = vmatprep.subr.mxu0 0.0
  %1105 = vmatpush1.msra.mxu0 0.0
  %1106 = vmatprep.subr.mxu0 0.0
  %1107 = vmatpush1.msra.mxu0 0.0
  %1108 = vmatprep.subr.mxu0 0.0
  %1109 = vmatpush1.msra.mxu0 0.0
  %1110 = vmatprep.subr.mxu0 0.0
  %1111 = vmatpush1.msra.mxu0 0.0
  %1112 = vmatprep.subr.mxu0 0.0
  %1113 = vmatpush1.msra.mxu0 0.0
  %1114 = vmatprep.mubr.f32.mxu0 0.0
  %1115 = vmatmul.mubr.f32.gmra.mrb[0].mxu0 %v1048
  %v1116 = vpop.f32.mrb[0].mxu0
  %v1117 = vadd.f32 0.0, %v1116
  %v1118 = vpop.f32.mrb[0].mxu0
  %1119 = vdwg.mxu0
  %v1120 = vadd.f32 %v1046, %v1117
  %v1121 = vtanh.pop %v1120
  %v1122 = vld [vmem:[#allocation3 + $0x10] sm:$0xff]
  %v1124 = vsel %vm184, %v1121, 0
  %1126 = vmatprep.subr.mxu0 0.0
  %1127 = vmatpush1.msra.mxu0 %v969
  %1128 = vmatprep.subr.mxu0 0.0
  %1129 = vmatpush1.msra.mxu0 %v970
  %1130 = vmatprep.subr.mxu0 0.0
  %1131 = vmatpush1.msra.mxu0 %v971
  %1132 = vmatprep.subr.mxu0 0.0
  %1133 = vmatpush1.msra.mxu0 %v972
  %1134 = vmatprep.subr.mxu0 0.0
  %1135 = vmatpush1.msra.mxu0 0.0
  %1136 = vmatprep.subr.mxu0 0.0
  %1137 = vmatpush1.msra.mxu0 0.0
  %1138 = vmatprep.subr.mxu0 0.0
  %1139 = vmatpush1.msra.mxu0 0.0
  %1140 = vmatprep.subr.mxu0 0.0
  %1141 = vmatpush1.msra.mxu0 0.0
  %1142 = vmatprep.subr.mxu0 0.0
  %1143 = vmatpush1.msra.mxu0 0.0
  %1144 = vmatprep.subr.mxu0 0.0
  %1145 = vmatpush1.msra.mxu0 0.0
  %1146 = vmatprep.subr.mxu0 0.0
  %1147 = vmatpush1.msra.mxu0 0.0
  %1148 = vmatprep.subr.mxu0 0.0
  %1149 = vmatpush1.msra.mxu0 0.0
  %1150 = vmatprep.subr.mxu0 0.0
  %1151 = vmatpush1.msra.mxu0 0.0
  %1152 = vmatprep.subr.mxu0 0.0
  %1153 = vmatpush1.msra.mxu0 0.0
  %1154 = vmatprep.subr.mxu0 0.0
  %1155 = vmatpush1.msra.mxu0 0.0
  %1156 = vmatprep.subr.mxu0 0.0
  %1157 = vmatpush1.msra.mxu0 0.0
  %1158 = vmatprep.subr.mxu0 0.0
  %1159 = vmatpush1.msra.mxu0 0.0
  %1160 = vmatprep.subr.mxu0 0.0
  %1161 = vmatpush1.msra.mxu0 0.0
  %1162 = vmatprep.subr.mxu0 0.0
  %1163 = vmatpush1.msra.mxu0 0.0
  %1164 = vmatprep.subr.mxu0 0.0
  %1165 = vmatpush1.msra.mxu0 0.0
  %1166 = vmatprep.subr.mxu0 0.0
  %1167 = vmatpush1.msra.mxu0 0.0
  %1168 = vmatprep.subr.mxu0 0.0
  %1169 = vmatpush1.msra.mxu0 0.0
  %1170 = vmatprep.subr.mxu0 0.0
  %1171 = vmatpush1.msra.mxu0 0.0
  %1172 = vmatprep.subr.mxu0 0.0
  %1173 = vmatpush1.msra.mxu0 0.0
  %1174 = vmatprep.subr.mxu0 0.0
  %1175 = vmatpush1.msra.mxu0 0.0
  %1176 = vmatprep.subr.mxu0 0.0
  %1177 = vmatpush1.msra.mxu0 0.0
  %1178 = vmatprep.subr.mxu0 0.0
  %1179 = vmatpush1.msra.mxu0 0.0
  %1180 = vmatprep.subr.mxu0 0.0
  %1181 = vmatpush1.msra.mxu0 0.0
  %1182 = vmatprep.subr.mxu0 0.0
  %1183 = vmatpush1.msra.mxu0 0.0
  %1184 = vmatprep.subr.mxu0 0.0
  %1185 = vmatpush1.msra.mxu0 0.0
  %1186 = vmatprep.subr.mxu0 0.0
  %1187 = vmatpush1.msra.mxu0 0.0
  %1188 = vmatprep.subr.mxu0 0.0
  %1189 = vmatpush1.msra.mxu0 0.0
  %1190 = vmatprep.mubr.f32.mxu0 0.0
  %1191 = vmatmul.mubr.f32.gmra.mrb[0].mxu0 %v1124
  %v1192 = vpop.f32.mrb[0].mxu0
  %v1193 = vadd.f32 0.0, %v1192
  %v1194 = vpop.f32.mrb[0].mxu0
  %1195 = vdwg.mxu0
  %v1196 = vadd.f32 %v1122, %v1193
  %v1197 = vtanh.pop %v1196
  %v1198 = vld [vmem:[#allocation3 + $0x18] sm:$0xff]
  %v1200 = vsel %vm184, %v1197, 0
  %1202 = vmatprep.subr.mxu0 0.0
  %1203 = vmatpush1.msra.mxu0 %v969
  %1204 = vmatprep.subr.mxu0 0.0
  %1205 = vmatpush1.msra.mxu0 %v970
  %1206 = vmatprep.subr.mxu0 0.0
  %1207 = vmatpush1.msra.mxu0 %v971
  %1208 = vmatprep.subr.mxu0 0.0
  %1209 = vmatpush1.msra.mxu0 %v972
  %1210 = vmatprep.subr.mxu0 0.0
  %1211 = vmatpush1.msra.mxu0 0.0
  %1212 = vmatprep.subr.mxu0 0.0
  %1213 = vmatpush1.msra.mxu0 0.0
  %1214 = vmatprep.subr.mxu0 0.0
  %1215 = vmatpush1.msra.mxu0 0.0
  %1216 = vmatprep.subr.mxu0 0.0
  %1217 = vmatpush1.msra.mxu0 0.0
  %1218 = vmatprep.subr.mxu0 0.0
  %1219 = vmatpush1.msra.mxu0 0.0
  %1220 = vmatprep.subr.mxu0 0.0
  %1221 = vmatpush1.msra.mxu0 0.0
  %1222 = vmatprep.subr.mxu0 0.0
  %1223 = vmatpush1.msra.mxu0 0.0
  %1224 = vmatprep.subr.mxu0 0.0
  %1225 = vmatpush1.msra.mxu0 0.0
  %1226 = vmatprep.subr.mxu0 0.0
  %1227 = vmatpush1.msra.mxu0 0.0
  %1228 = vmatprep.subr.mxu0 0.0
  %1229 = vmatpush1.msra.mxu0 0.0
  %1230 = vmatprep.subr.mxu0 0.0
  %1231 = vmatpush1.msra.mxu0 0.0
  %1232 = vmatprep.subr.mxu0 0.0
  %1233 = vmatpush1.msra.mxu0 0.0
  %1234 = vmatprep.subr.mxu0 0.0
  %1235 = vmatpush1.msra.mxu0 0.0
  %1236 = vmatprep.subr.mxu0 0.0
  %1237 = vmatpush1.msra.mxu0 0.0
  %1238 = vmatprep.subr.mxu0 0.0
  %1239 = vmatpush1.msra.mxu0 0.0
  %1240 = vmatprep.subr.mxu0 0.0
  %1241 = vmatpush1.msra.mxu0 0.0
  %1242 = vmatprep.subr.mxu0 0.0
  %1243 = vmatpush1.msra.mxu0 0.0
  %1244 = vmatprep.subr.mxu0 0.0
  %1245 = vmatpush1.msra.mxu0 0.0
  %1246 = vmatprep.subr.mxu0 0.0
  %1247 = vmatpush1.msra.mxu0 0.0
  %1248 = vmatprep.subr.mxu0 0.0
  %1249 = vmatpush1.msra.mxu0 0.0
  %1250 = vmatprep.subr.mxu0 0.0
  %1251 = vmatpush1.msra.mxu0 0.0
  %1252 = vmatprep.subr.mxu0 0.0
  %1253 = vmatpush1.msra.mxu0 0.0
  %1254 = vmatprep.subr.mxu0 0.0
  %1255 = vmatpush1.msra.mxu0 0.0
  %1256 = vmatprep.subr.mxu0 0.0
  %1257 = vmatpush1.msra.mxu0 0.0
  %1258 = vmatprep.subr.mxu0 0.0
  %1259 = vmatpush1.msra.mxu0 0.0
  %1260 = vmatprep.subr.mxu0 0.0
  %1261 = vmatpush1.msra.mxu0 0.0
  %1262 = vmatprep.subr.mxu0 0.0
  %1263 = vmatpush1.msra.mxu0 0.0
  %1264 = vmatprep.subr.mxu0 0.0
  %1265 = vmatpush1.msra.mxu0 0.0
  %1266 = vmatprep.mubr.f32.mxu0 0.0
  %1267 = vmatmul.mubr.f32.gmra.mrb[0].mxu0 %v1200
  %v1268 = vpop.f32.mrb[0].mxu0
  %v1269 = vadd.f32 0.0, %v1268
  %v1270 = vpop.f32.mrb[0].mxu0
  %1271 = vdwg.mxu0
  %v1272 = vadd.f32 %v1198, %v1269
  %v1273 = vtanh.pop %v1272
  %v1274 = vld [vmem:[#allocation3 + $0x20] sm:$0xff]
  %v1276 = vsel %vm184, %v1273, 0
  %1278 = vmatprep.subr.mxu0 0.0
  %1279 = vmatpush1.msra.mxu0 %v969
  %1280 = vmatprep.subr.mxu0 0.0
  %1281 = vmatpush1.msra.mxu0 %v970
  %1282 = vmatprep.subr.mxu0 0.0
  %1283 = vmatpush1.msra.mxu0 %v971
  %1284 = vmatprep.subr.mxu0 0.0
  %1285 = vmatpush1.msra.mxu0 %v972
  %1286 = vmatprep.subr.mxu0 0.0
  %1287 = vmatpush1.msra.mxu0 0.0
  %1288 = vmatprep.subr.mxu0 0.0
  %1289 = vmatpush1.msra.mxu0 0.0
  %1290 = vmatprep.subr.mxu0 0.0
  %1291 = vmatpush1.msra.mxu0 0.0
  %1292 = vmatprep.subr.mxu0 0.0
  %1293 = vmatpush1.msra.mxu0 0.0
  %1294 = vmatprep.subr.mxu0 0.0
  %1295 = vmatpush1.msra.mxu0 0.0
  %1296 = vmatprep.subr.mxu0 0.0
  %1297 = vmatpush1.msra.mxu0 0.0
  %1298 = vmatprep.subr.mxu0 0.0
  %1299 = vmatpush1.msra.mxu0 0.0
  %1300 = vmatprep.subr.mxu0 0.0
  %1301 = vmatpush1.msra.mxu0 0.0
  %1302 = vmatprep.subr.mxu0 0.0
  %1303 = vmatpush1.msra.mxu0 0.0
  %1304 = vmatprep.subr.mxu0 0.0
  %1305 = vmatpush1.msra.mxu0 0.0
  %1306 = vmatprep.subr.mxu0 0.0
  %1307 = vmatpush1.msra.mxu0 0.0
  %1308 = vmatprep.subr.mxu0 0.0
  %1309 = vmatpush1.msra.mxu0 0.0
  %1310 = vmatprep.subr.mxu0 0.0
  %1311 = vmatpush1.msra.mxu0 0.0
  %1312 = vmatprep.subr.mxu0 0.0
  %1313 = vmatpush1.msra.mxu0 0.0
  %1314 = vmatprep.subr.mxu0 0.0
  %1315 = vmatpush1.msra.mxu0 0.0
  %1316 = vmatprep.subr.mxu0 0.0
  %1317 = vmatpush1.msra.mxu0 0.0
  %1318 = vmatprep.subr.mxu0 0.0
  %1319 = vmatpush1.msra.mxu0 0.0
  %1320 = vmatprep.subr.mxu0 0.0
  %1321 = vmatpush1.msra.mxu0 0.0
  %1322 = vmatprep.subr.mxu0 0.0
  %1323 = vmatpush1.msra.mxu0 0.0
  %1324 = vmatprep.subr.mxu0 0.0
  %1325 = vmatpush1.msra.mxu0 0.0
  %1326 = vmatprep.subr.mxu0 0.0
  %1327 = vmatpush1.msra.mxu0 0.0
  %1328 = vmatprep.subr.mxu0 0.0
  %1329 = vmatpush1.msra.mxu0 0.0
  %1330 = vmatprep.subr.mxu0 0.0
  %1331 = vmatpush1.msra.mxu0 0.0
  %1332 = vmatprep.subr.mxu0 0.0
  %1333 = vmatpush1.msra.mxu0 0.0
  %1334 = vmatprep.subr.mxu0 0.0
  %1335 = vmatpush1.msra.mxu0 0.0
  %1336 = vmatprep.subr.mxu0 0.0
  %1337 = vmatpush1.msra.mxu0 0.0
  %1338 = vmatprep.subr.mxu0 0.0
  %1339 = vmatpush1.msra.mxu0 0.0
  %1340 = vmatprep.subr.mxu0 0.0
  %1341 = vmatpush1.msra.mxu0 0.0
  %1342 = vmatprep.mubr.f32.mxu0 0.0
  %1343 = vmatmul.mubr.f32.gmra.mrb[0].mxu0 %v1276
  %v1344 = vpop.f32.mrb[0].mxu0
  %v1345 = vadd.f32 0.0, %v1344
  %v1346 = vpop.f32.mrb[0].mxu0
  %1347 = vdwg.mxu0
  %v1348 = vadd.f32 %v1274, %v1345
  %v1349 = vtanh.pop %v1348
  %v1350 = vld [vmem:[#allocation3 + $0x28] sm:$0xff]
  %v1352 = vsel %vm184, %v1349, 0
  %1354 = vmatprep.subr.mxu0 0.0
  %1355 = vmatpush1.msra.mxu0 %v969
  %1356 = vmatprep.subr.mxu0 0.0
  %1357 = vmatpush1.msra.mxu0 %v970
  %1358 = vmatprep.subr.mxu0 0.0
  %1359 = vmatpush1.msra.mxu0 %v971
  %1360 = vmatprep.subr.mxu0 0.0
  %1361 = vmatpush1.msra.mxu0 %v972
  %1362 = vmatprep.subr.mxu0 0.0
  %1363 = vmatpush1.msra.mxu0 0.0
  %1364 = vmatprep.subr.mxu0 0.0
  %1365 = vmatpush1.msra.mxu0 0.0
  %1366 = vmatprep.subr.mxu0 0.0
  %1367 = vmatpush1.msra.mxu0 0.0
  %1368 = vmatprep.subr.mxu0 0.0
  %1369 = vmatpush1.msra.mxu0 0.0
  %1370 = vmatprep.subr.mxu0 0.0
  %1371 = vmatpush1.msra.mxu0 0.0
  %1372 = vmatprep.subr.mxu0 0.0
  %1373 = vmatpush1.msra.mxu0 0.0
  %1374 = vmatprep.subr.mxu0 0.0
  %1375 = vmatpush1.msra.mxu0 0.0
  %1376 = vmatprep.subr.mxu0 0.0
  %1377 = vmatpush1.msra.mxu0 0.0
  %1378 = vmatprep.subr.mxu0 0.0
  %1379 = vmatpush1.msra.mxu0 0.0
  %1380 = vmatprep.subr.mxu0 0.0
  %1381 = vmatpush1.msra.mxu0 0.0
  %1382 = vmatprep.subr.mxu0 0.0
  %1383 = vmatpush1.msra.mxu0 0.0
  %1384 = vmatprep.subr.mxu0 0.0
  %1385 = vmatpush1.msra.mxu0 0.0
  %1386 = vmatprep.subr.mxu0 0.0
  %1387 = vmatpush1.msra.mxu0 0.0
  %1388 = vmatprep.subr.mxu0 0.0
  %1389 = vmatpush1.msra.mxu0 0.0
  %1390 = vmatprep.subr.mxu0 0.0
  %1391 = vmatpush1.msra.mxu0 0.0
  %1392 = vmatprep.subr.mxu0 0.0
  %1393 = vmatpush1.msra.mxu0 0.0
  %1394 = vmatprep.subr.mxu0 0.0
  %1395 = vmatpush1.msra.mxu0 0.0
  %1396 = vmatprep.subr.mxu0 0.0
  %1397 = vmatpush1.msra.mxu0 0.0
  %1398 = vmatprep.subr.mxu0 0.0
  %1399 = vmatpush1.msra.mxu0 0.0
  %1400 = vmatprep.subr.mxu0 0.0
  %1401 = vmatpush1.msra.mxu0 0.0
  %1402 = vmatprep.subr.mxu0 0.0
  %1403 = vmatpush1.msra.mxu0 0.0
  %1404 = vmatprep.subr.mxu0 0.0
  %1405 = vmatpush1.msra.mxu0 0.0
  %1406 = vmatprep.subr.mxu0 0.0
  %1407 = vmatpush1.msra.mxu0 0.0
  %1408 = vmatprep.subr.mxu0 0.0
  %1409 = vmatpush1.msra.mxu0 0.0
  %1410 = vmatprep.subr.mxu0 0.0
  %1411 = vmatpush1.msra.mxu0 0.0
  %1412 = vmatprep.subr.mxu0 0.0
  %1413 = vmatpush1.msra.mxu0 0.0
  %1414 = vmatprep.subr.mxu0 0.0
  %1415 = vmatpush1.msra.mxu0 0.0
  %1416 = vmatprep.subr.mxu0 0.0
  %1417 = vmatpush1.msra.mxu0 0.0
  %1418 = vmatprep.mubr.f32.mxu0 0.0
  %1419 = vmatmul.mubr.f32.gmra.mrb[0].mxu0 %v1352
  %v1420 = vpop.f32.mrb[0].mxu0
  %v1421 = vadd.f32 0.0, %v1420
  %v1422 = vpop.f32.mrb[0].mxu0
  %1423 = vdwg.mxu0
  %v1424 = vadd.f32 %v1350, %v1421
  %v1425 = vtanh.pop %v1424
  %v1426 = vld [vmem:[#allocation3 + $0x30] sm:$0xff]
  %v1428 = vsel %vm184, %v1425, 0
  %1430 = vmatprep.subr.mxu0 0.0
  %1431 = vmatpush1.msra.mxu0 %v969
  %1432 = vmatprep.subr.mxu0 0.0
  %1433 = vmatpush1.msra.mxu0 %v970
  %1434 = vmatprep.subr.mxu0 0.0
  %1435 = vmatpush1.msra.mxu0 %v971
  %1436 = vmatprep.subr.mxu0 0.0
  %1437 = vmatpush1.msra.mxu0 %v972
  %1438 = vmatprep.subr.mxu0 0.0
  %1439 = vmatpush1.msra.mxu0 0.0
  %1440 = vmatprep.subr.mxu0 0.0
  %1441 = vmatpush1.msra.mxu0 0.0
  %1442 = vmatprep.subr.mxu0 0.0
  %1443 = vmatpush1.msra.mxu0 0.0
  %1444 = vmatprep.subr.mxu0 0.0
  %1445 = vmatpush1.msra.mxu0 0.0
  %1446 = vmatprep.subr.mxu0 0.0
  %1447 = vmatpush1.msra.mxu0 0.0
  %1448 = vmatprep.subr.mxu0 0.0
  %1449 = vmatpush1.msra.mxu0 0.0
  %1450 = vmatprep.subr.mxu0 0.0
  %1451 = vmatpush1.msra.mxu0 0.0
  %1452 = vmatprep.subr.mxu0 0.0
  %1453 = vmatpush1.msra.mxu0 0.0
  %1454 = vmatprep.subr.mxu0 0.0
  %1455 = vmatpush1.msra.mxu0 0.0
  %1456 = vmatprep.subr.mxu0 0.0
  %1457 = vmatpush1.msra.mxu0 0.0
  %1458 = vmatprep.subr.mxu0 0.0
  %1459 = vmatpush1.msra.mxu0 0.0
  %1460 = vmatprep.subr.mxu0 0.0
  %1461 = vmatpush1.msra.mxu0 0.0
  %1462 = vmatprep.subr.mxu0 0.0
  %1463 = vmatpush1.msra.mxu0 0.0
  %1464 = vmatprep.subr.mxu0 0.0
  %1465 = vmatpush1.msra.mxu0 0.0
  %1466 = vmatprep.subr.mxu0 0.0
  %1467 = vmatpush1.msra.mxu0 0.0
  %1468 = vmatprep.subr.mxu0 0.0
  %1469 = vmatpush1.msra.mxu0 0.0
  %1470 = vmatprep.subr.mxu0 0.0
  %1471 = vmatpush1.msra.mxu0 0.0
  %1472 = vmatprep.subr.mxu0 0.0
  %1473 = vmatpush1.msra.mxu0 0.0
  %1474 = vmatprep.subr.mxu0 0.0
  %1475 = vmatpush1.msra.mxu0 0.0
  %1476 = vmatprep.subr.mxu0 0.0
  %1477 = vmatpush1.msra.mxu0 0.0
  %1478 = vmatprep.subr.mxu0 0.0
  %1479 = vmatpush1.msra.mxu0 0.0
  %1480 = vmatprep.subr.mxu0 0.0
  %1481 = vmatpush1.msra.mxu0 0.0
  %1482 = vmatprep.subr.mxu0 0.0
  %1483 = vmatpush1.msra.mxu0 0.0
  %1484 = vmatprep.subr.mxu0 0.0
  %1485 = vmatpush1.msra.mxu0 0.0
  %1486 = vmatprep.subr.mxu0 0.0
  %1487 = vmatpush1.msra.mxu0 0.0
  %1488 = vmatprep.subr.mxu0 0.0
  %1489 = vmatpush1.msra.mxu0 0.0
  %1490 = vmatprep.subr.mxu0 0.0
  %1491 = vmatpush1.msra.mxu0 0.0
  %1492 = vmatprep.subr.mxu0 0.0
  %1493 = vmatpush1.msra.mxu0 0.0
  %1494 = vmatprep.mubr.f32.mxu0 0.0
  %1495 = vmatmul.mubr.f32.gmra.mrb[0].mxu0 %v1428
  %v1496 = vpop.f32.mrb[0].mxu0
  %v1497 = vadd.f32 0.0, %v1496
  %v1498 = vpop.f32.mrb[0].mxu0
  %1499 = vdwg.mxu0
  %v1500 = vadd.f32 %v1426, %v1497
  %v1501 = vtanh.pop %v1500
  %v1502 = vld [vmem:[#allocation3 + $0x38] sm:$0xff]
  %v1504 = vsel %vm184, %v1501, 0
  %1506 = vmatprep.subr.mxu0 0.0
  %1507 = vmatpush1.msra.mxu0 %v969
  %1508 = vmatprep.subr.mxu0 0.0
  %1509 = vmatpush1.msra.mxu0 %v970
  %1510 = vmatprep.subr.mxu0 0.0
  %1511 = vmatpush1.msra.mxu0 %v971
  %1512 = vmatprep.subr.mxu0 0.0
  %1513 = vmatpush1.msra.mxu0 %v972
  %1514 = vmatprep.subr.mxu0 0.0
  %1515 = vmatpush1.msra.mxu0 0.0
  %1516 = vmatprep.subr.mxu0 0.0
  %1517 = vmatpush1.msra.mxu0 0.0
  %1518 = vmatprep.subr.mxu0 0.0
  %1519 = vmatpush1.msra.mxu0 0.0
  %1520 = vmatprep.subr.mxu0 0.0
  %1521 = vmatpush1.msra.mxu0 0.0
  %1522 = vmatprep.subr.mxu0 0.0
  %1523 = vmatpush1.msra.mxu0 0.0
  %1524 = vmatprep.subr.mxu0 0.0
  %1525 = vmatpush1.msra.mxu0 0.0
  %1526 = vmatprep.subr.mxu0 0.0
  %1527 = vmatpush1.msra.mxu0 0.0
  %1528 = vmatprep.subr.mxu0 0.0
  %1529 = vmatpush1.msra.mxu0 0.0
  %1530 = vmatprep.subr.mxu0 0.0
  %1531 = vmatpush1.msra.mxu0 0.0
  %1532 = vmatprep.subr.mxu0 0.0
  %1533 = vmatpush1.msra.mxu0 0.0
  %1534 = vmatprep.subr.mxu0 0.0
  %1535 = vmatpush1.msra.mxu0 0.0
  %1536 = vmatprep.subr.mxu0 0.0
  %1537 = vmatpush1.msra.mxu0 0.0
  %1538 = vmatprep.subr.mxu0 0.0
  %1539 = vmatpush1.msra.mxu0 0.0
  %1540 = vmatprep.subr.mxu0 0.0
  %1541 = vmatpush1.msra.mxu0 0.0
  %1542 = vmatprep.subr.mxu0 0.0
  %1543 = vmatpush1.msra.mxu0 0.0
  %1544 = vmatprep.subr.mxu0 0.0
  %1545 = vmatpush1.msra.mxu0 0.0
  %1546 = vmatprep.subr.mxu0 0.0
  %1547 = vmatpush1.msra.mxu0 0.0
  %1548 = vmatprep.subr.mxu0 0.0
  %1549 = vmatpush1.msra.mxu0 0.0
  %1550 = vmatprep.subr.mxu0 0.0
  %1551 = vmatpush1.msra.mxu0 0.0
  %1552 = vmatprep.subr.mxu0 0.0
  %1553 = vmatpush1.msra.mxu0 0.0
  %1554 = vmatprep.subr.mxu0 0.0
  %1555 = vmatpush1.msra.mxu0 0.0
  %1556 = vmatprep.subr.mxu0 0.0
  %1557 = vmatpush1.msra.mxu0 0.0
  %1558 = vmatprep.subr.mxu0 0.0
  %1559 = vmatpush1.msra.mxu0 0.0
  %1560 = vmatprep.subr.mxu0 0.0
  %1561 = vmatpush1.msra.mxu0 0.0
  %1562 = vmatprep.subr.mxu0 0.0
  %1563 = vmatpush1.msra.mxu0 0.0
  %1564 = vmatprep.subr.mxu0 0.0
  %1565 = vmatpush1.msra.mxu0 0.0
  %1566 = vmatprep.subr.mxu0 0.0
  %1567 = vmatpush1.msra.mxu0 0.0
  %1568 = vmatprep.subr.mxu0 0.0
  %1569 = vmatpush1.msra.mxu0 0.0
  %1570 = vmatprep.mubr.f32.mxu0 0.0
  %1571 = vmatmul.mubr.f32.gmra.mrb[0].mxu0 %v1504
  %v1572 = vpop.f32.mrb[0].mxu0
  %v1573 = vadd.f32 0.0, %v1572
  %v1574 = vpop.f32.mrb[0].mxu0
  %1575 = vdwg.mxu0
  %v1576 = vadd.f32 %v1502, %v1573
  %v1577 = vtanh.pop %v1576
  %v1578 = vld [vmem:[%s7] sm:$0xff]
  %v1579 = vld [vmem:[%s7 + $0x8] sm:$0xff]
  %v1580 = vld [vmem:[%s7 + $0x10] sm:$0xff]
  %v1581 = vld [vmem:[%s7 + $0x18] sm:$0xff]
  %v1582 = vld [vmem:[#allocation4] sm:$0x1]
  %v1584 = vlaneseq
  %v1585 = vshrl.u32 %v1584, 7
  %v1586 = vsub.s32 0, %v1585
  %v1587 = vrot.slane %v1582, %v1586
  %v1590 = vsel %vm184, %v1577, 0
  %1592 = vmatprep.subr.mxu0 0.0
  %1593 = vmatpush1.msra.mxu0 %v1578
  %1594 = vmatprep.subr.mxu0 0.0
  %1595 = vmatpush1.msra.mxu0 %v1579
  %1596 = vmatprep.subr.mxu0 0.0
  %1597 = vmatpush1.msra.mxu0 %v1580
  %1598 = vmatprep.subr.mxu0 0.0
  %1599 = vmatpush1.msra.mxu0 %v1581
  %1600 = vmatprep.subr.mxu0 0.0
  %1601 = vmatpush1.msra.mxu0 0.0
  %1602 = vmatprep.subr.mxu0 0.0
  %1603 = vmatpush1.msra.mxu0 0.0
  %1604 = vmatprep.subr.mxu0 0.0
  %1605 = vmatpush1.msra.mxu0 0.0
  %1606 = vmatprep.subr.mxu0 0.0
  %1607 = vmatpush1.msra.mxu0 0.0
  %1608 = vmatprep.subr.mxu0 0.0
  %1609 = vmatpush1.msra.mxu0 0.0
  %1610 = vmatprep.subr.mxu0 0.0
  %1611 = vmatpush1.msra.mxu0 0.0
  %1612 = vmatprep.subr.mxu0 0.0
  %1613 = vmatpush1.msra.mxu0 0.0
  %1614 = vmatprep.subr.mxu0 0.0
  %1615 = vmatpush1.msra.mxu0 0.0
  %1616 = vmatprep.subr.mxu0 0.0
  %1617 = vmatpush1.msra.mxu0 0.0
  %1618 = vmatprep.subr.mxu0 0.0
  %1619 = vmatpush1.msra.mxu0 0.0
  %1620 = vmatprep.subr.mxu0 0.0
  %1621 = vmatpush1.msra.mxu0 0.0
  %1622 = vmatprep.subr.mxu0 0.0
  %1623 = vmatpush1.msra.mxu0 0.0
  %1624 = vmatprep.subr.mxu0 0.0
  %1625 = vmatpush1.msra.mxu0 0.0
  %1626 = vmatprep.subr.mxu0 0.0
  %1627 = vmatpush1.msra.mxu0 0.0
  %1628 = vmatprep.subr.mxu0 0.0
  %1629 = vmatpush1.msra.mxu0 0.0
  %1630 = vmatprep.subr.mxu0 0.0
  %1631 = vmatpush1.msra.mxu0 0.0
  %1632 = vmatprep.subr.mxu0 0.0
  %1633 = vmatpush1.msra.mxu0 0.0
  %1634 = vmatprep.subr.mxu0 0.0
  %1635 = vmatpush1.msra.mxu0 0.0
  %1636 = vmatprep.subr.mxu0 0.0
  %1637 = vmatpush1.msra.mxu0 0.0
  %1638 = vmatprep.subr.mxu0 0.0
  %1639 = vmatpush1.msra.mxu0 0.0
  %1640 = vmatprep.subr.mxu0 0.0
  %1641 = vmatpush1.msra.mxu0 0.0
  %1642 = vmatprep.subr.mxu0 0.0
  %1643 = vmatpush1.msra.mxu0 0.0
  %1644 = vmatprep.subr.mxu0 0.0
  %1645 = vmatpush1.msra.mxu0 0.0
  %1646 = vmatprep.subr.mxu0 0.0
  %1647 = vmatpush1.msra.mxu0 0.0
  %1648 = vmatprep.subr.mxu0 0.0
  %1649 = vmatpush1.msra.mxu0 0.0
  %1650 = vmatprep.subr.mxu0 0.0
  %1651 = vmatpush1.msra.mxu0 0.0
  %1652 = vmatprep.subr.mxu0 0.0
  %1653 = vmatpush1.msra.mxu0 0.0
  %1654 = vmatprep.subr.mxu0 0.0
  %1655 = vmatpush1.msra.mxu0 0.0
  %1656 = vmatprep.mubr.f32.mxu0 0.0
  %1657 = vmatmul.mubr.f32.gmra.mrb[0].mxu0 %v1590
  %v1658 = vpop.f32.mrb[0].mxu0
  %v1659 = vadd.f32 %v1587, %v1658
  %v1660 = vpop.f32.mrb[0].mxu0
  %1661 = vdwg.mxu0
  %v1662 = vxor.u32 %v1659, 2147483648
  %v1663 = vmul.f32 %v1662, 1.442695
  %v1664 = vpow.pop %v1663
  %v1665 = vadd.f32 %v1664, 1.0
  %v1666 = vrcp.pop %v1665
  %v1667 = vmul.f32 1.0, %v1666
  %vm1668 = vcmask 7168
  %1669 = vst.msk [vmem:[%s9] sm:$0xff] %vm1668, %v1667
  // Predicated region
  $region38: #{tpu_custom_call.1} parent=0 // pred_check
    _
  $region39: #{tpu_custom_call.1} parent=0 // pred_check_branch
    %1671 = sbr.rel (0) target = $region41
  $region40: #{tpu_custom_call.1} parent=0 // pred_region
    _
  $region41: #{tpu_custom_call.1} parent=0 // pred_fallthru
    _
  // Predicated region
  $region42: #{tpu_custom_call.1} parent=0 // pred_check
    _
  $region43: #{tpu_custom_call.1} parent=0 // pred_check_branch
    %1673 = sbr.rel (0) target = $region45
  $region44: #{tpu_custom_call.1} parent=0 // pred_region
    _
  $region45: #{tpu_custom_call.1} parent=0 // pred_fallthru
    _

</llo_original>
